<compile_context>
chip_gen: v7x
topology: tpu7x:2x2x1
jax: 0.10.0
libtpu: 0.0.40
codegen_flags: <defaults>
</compile_context>

<pallas_src>
from functools import partial

import jax
import jax.numpy as jnp
from jax.experimental import pallas as pl
from jax.experimental.pallas import tpu as pltpu


# --------------------------------------------------------------------------- #
# helpers
# --------------------------------------------------------------------------- #
def _round_up(x, m):
    return (x + m - 1) // m * m


def _pick_time_tile(t_out, max_tile=256):
    max_tile = max(8, _round_up(max_tile, 8))
    if t_out >= max_tile:
        return max_tile
    return _round_up(t_out, 8)


def _pick_channel_tile(cout, t_rows, budget_bytes):
    """Largest multiple-of-128 divisor of cout whose (t_rows, ct) f32 in+out
    blocks (double-buffered) fit the budget; full cout when not 128-aligned."""
    if cout % 128:
        return cout
    best = 128
    for c in range(128, cout + 1, 128):
        if cout % c == 0 and 4 * t_rows * c * 4 <= budget_bytes:
            best = c
    return best


def _pick_vmem_limit():
    # ~half of physical VMEM: 64 MiB on v5e/v6e (128 MiB parts), 32 MiB on v7x
    # (64 MiB part).  Conservative fallback if the query is unavailable.
    try:
        cap = pltpu.get_tpu_info().vmem_capacity_bytes
        return int(min(96 * 1024 * 1024, max(32 * 1024 * 1024, cap // 2)))
    except Exception:
        return 32 * 1024 * 1024


_SQRT_HALF = 0.7071067811865476


def _erf_approx(x):
    # Abramowitz & Stegun 7.1.26, |abs error| < 1.5e-7.  Only mul/add/exp
    # (EUP slot) plus an EUP approx reciprocal, so it lowers cleanly in Mosaic.
    a1, a2, a3 = 0.254829592, -0.284496736, 1.421413741
    a4, a5, p = -1.453152027, 1.061405429, 0.3275911
    ax = jnp.abs(x)
    t = pl.reciprocal(1.0 + p * ax, approx=True)
    poly = ((((a5 * t + a4) * t + a3) * t + a2) * t + a1) * t
    r = 1.0 - poly * jnp.exp(-ax * ax)
    return jnp.where(x >= 0.0, r, -r)


def _gelu_erf(x):
    # exact-erf GELU (matches torch.nn.functional.gelu default) to ~1e-6
    return 0.5 * x * (1.0 + _erf_approx(x * _SQRT_HALF))


# --------------------------------------------------------------------------- #
# kernels
# --------------------------------------------------------------------------- #
def _conv_gelu_kernel(x_ref, w_ref, *refs, k_taps, apply_bias, apply_gelu):
    """One (batch, output-time-tile) grid step of the strided 1-D conv.

    x_ref : (S, Tg, Cin)    stride-phase-major input (every load is a
                            contiguous, 8-aligned per-phase sublane slab).
    w_ref : (K*Cin, Cout)   weight pre-reshaped / pre-cast at param-build time.
    refs  : (b_ref?, o_ref) optional (1, Cout) bias row, then the (Tt, Cout)
                            channels-last, lane-dense output tile.
    """
    if apply_bias:
        b_ref, o_ref = refs
    else:
        b_ref, (o_ref,) = None, refs

    s_phases = x_ref.shape[0]
    tt = o_ref.shape[0]
    jmax = (k_taps - 1) // s_phases
    mm_dtype = w_ref.dtype

    # tile start on the output-time axis; Tt is a multiple of 8 -> aligned start
    t0 = pl.multiple_of(pl.program_id(1) * tt, tt)

    # Build the (Tt, K*Cin) patch matrix: one aligned slab load per stride
    # phase (cast once -- usually a no-op since the slab is stored in the
    # matmul dtype), cheap static sublane shifts per tap, lane-axis concat in
    # tap-major order to match the (K, Cin, Cout) -> (K*Cin, Cout) reshape.
    pieces = [None] * k_taps
    for phase in range(min(s_phases, k_taps)):
        slab = x_ref[phase, pl.ds(t0, tt + jmax), :].astype(mm_dtype)
        for k in range(phase, k_taps, s_phases):
            j = k // s_phases
            pieces[k] = jax.lax.slice_in_dim(slab, j, j + tt, axis=0)
    patches = pieces[0] if k_taps == 1 else jnp.concatenate(pieces, axis=-1)

    # Single fused contraction over K*Cin: the MXU accumulates internally
    # (MRF/MRB), so there is no per-tap f32 accumulator chain to spill/store.
    acc = jnp.dot(patches, w_ref[...], preferred_element_type=jnp.float32)

    if apply_bias:
        acc = acc + b_ref[...].astype(jnp.float32)
    if apply_gelu:                              # fused epilogue (no-norm layers)
        acc = _gelu_erf(acc)
    o_ref[...] = acc.astype(o_ref.dtype)


def _groupnorm_gelu_kernel(x_ref, g_ref, b_ref, o_ref, *, t_valid, eps):
    """GroupNorm(num_groups == num_channels) + affine + GELU, fused.

    x_ref/o_ref : (Tp, Ct)  one batch row, one lane-dense channel tile.
    g_ref/b_ref : (1, Ct)   per-channel affine parameters.
    Statistics are taken over the valid (un-padded) time rows only.
    """
    x = x_ref[...].astype(jnp.float32)
    tp = x.shape[0]
    if t_valid == tp:
        mean = jnp.mean(x, axis=0, keepdims=True)
        xc = x - mean
        var = jnp.mean(xc * xc, axis=0, keepdims=True)
    else:
        # (Tp, 1) mask, broadcast over lanes in the multiplies.
        row = jax.lax.broadcasted_iota(jnp.int32, (tp, 1), 0)
        m = (row < t_valid).astype(jnp.float32)
        inv_n = 1.0 / float(t_valid)
        mean = jnp.sum(x * m, axis=0, keepdims=True) * inv_n
        xc = x - mean
        var = jnp.sum(xc * xc * m, axis=0, keepdims=True) * inv_n
    y = xc * jax.lax.rsqrt(var + eps) * g_ref[...] + b_ref[...]
    o_ref[...] = _gelu_erf(y).astype(o_ref.dtype)


# --------------------------------------------------------------------------- #
# layer forward (channels-last core + NCHW wrapper)
# --------------------------------------------------------------------------- #
def wavlm_feature_encoder_layer_tc(x_tc, params, *, stride, do_norm, eps=1e-5,
                                   max_time_tile=256):
    """Channels-last forward: (B, T, Cin) -> (B, T_out, Cout)."""
    w2d = params['w_2d']                       # (K*Cin, Cout), pre-transposed
    b_sz, t_in, cin = x_tc.shape
    kc, cout = w2d.shape
    assert kc % cin == 0
    k_taps = kc // cin
    s = int(stride)
    t_out = (t_in - k_taps) // s + 1
    assert t_out > 0

    tt = _pick_time_tile(t_out, max_time_tile)
    t_out_p = _round_up(t_out, tt)

    if cin == 1:
        # Layer 0: the input is ~K/stride smaller than the output, so a cheap
        # XLA-side im2col gives lane-dense (T_out, K) patches and the conv
        # becomes one (Tt, K) x (K, Cout) dot (no 1-lane slab, no broadcast FMAs).
        idx = jnp.arange(t_out)[:, None] * s + jnp.arange(k_taps)[None, :]
        xg = x_tc[:, :, 0].astype(w2d.dtype)[:, idx]           # (B, T_out, K)
        xg = jnp.pad(xg, ((0, 0), (0, t_out_p - t_out), (0, 0)))
        xg = xg[:, None, :, :]                                 # (B, 1, T_out_p, K)
        k_eff, s_eff, cin_eff = 1, 1, k_taps
        t_g = t_out_p
    else:
        # Layers >= 1: stride-phase-major repack (one XLA transpose, stored in
        # the matmul dtype so its HBM footprint is halved for bf16 layers):
        # xg[b, phase, t, c] == x[b, t*s + phase, c].
        # TODO(synk): reading the channels-last input directly with strided /
        # overlapping-window loads would remove this extra pass over the input.
        k_eff, s_eff, cin_eff = k_taps, s, cin
        t_g = t_out_p + pl.cdiv(k_taps, s)
        xp = jnp.pad(x_tc.astype(w2d.dtype), ((0, 0), (0, t_g * s - t_in), (0, 0)))
        xg = jnp.transpose(xp.reshape(b_sz, t_g, s, cin), (0, 2, 1, 3))

    apply_bias = (not do_norm) and ('b' in params)
    apply_gelu = not do_norm

    vmem_limit = _pick_vmem_limit()
    cparams = pltpu.CompilerParams(
        dimension_semantics=("parallel", "parallel"),
        vmem_limit_bytes=vmem_limit)

    conv = partial(_conv_gelu_kernel, k_taps=k_eff, apply_bias=apply_bias,
                   apply_gelu=apply_gelu)
    in_specs = [
        # full (padded) time window, resident across the time-tile axis
        pl.BlockSpec((None, s_eff, t_g, cin_eff), lambda bi, ti: (bi, 0, 0, 0)),
        pl.BlockSpec((k_eff * cin_eff, cout), lambda bi, ti: (0, 0)),
    ]
    operands = [xg, w2d]
    if apply_bias:
        in_specs.append(pl.BlockSpec((1, cout), lambda bi, ti: (0, 0)))
        operands.append(params['b'])

    y = pl.pallas_call(
        conv,
        grid=(b_sz, t_out_p // tt),
        in_specs=in_specs,
        out_specs=pl.BlockSpec((None, tt, cout), lambda bi, ti: (bi, ti, 0)),
        out_shape=jax.ShapeDtypeStruct((b_sz, t_out_p, cout), jnp.float32),
        compiler_params=cparams,
    )(*operands)

    if do_norm:
        # GroupNorm(groups == channels): per-(batch, channel) stats over time
        # -> channel tiles are embarrassingly parallel.
        ct = _pick_channel_tile(cout, t_out_p, vmem_limit // 2)
        norm = partial(_groupnorm_gelu_kernel, t_valid=t_out, eps=eps)
        y = pl.pallas_call(
            norm,
            grid=(b_sz, cout // ct),
            in_specs=[
                pl.BlockSpec((None, t_out_p, ct), lambda bi, ci: (bi, 0, ci)),
                pl.BlockSpec((1, ct), lambda bi, ci: (0, ci)),
                pl.BlockSpec((1, ct), lambda bi, ci: (0, ci)),
            ],
            out_specs=pl.BlockSpec((None, t_out_p, ct),
                                   lambda bi, ci: (bi, 0, ci)),
            out_shape=jax.ShapeDtypeStruct((b_sz, t_out_p, cout), jnp.float32),
            compiler_params=cparams,
        )(y, params['gn_gamma'], params['gn_beta'])

    return y[:, :t_out, :]


def wavlm_feature_encoder_layer(hidden_states, params, *, stride, do_norm,
                                eps=1e-5):
    """NCHW drop-in wrapper: (B, Cin, 1, T) -> (B, Cout, 1, T_out).
    Prefer the channels-last core when stacking layers (avoids a transpose
    round-trip per layer)."""
    x_tc = jnp.transpose(hidden_states[:, :, 0, :], (0, 2, 1))
    y = wavlm_feature_encoder_layer_tc(x_tc, params, stride=stride,
                                       do_norm=do_norm, eps=eps)
    return jnp.transpose(y, (0, 2, 1))[:, :, None, :]


# --------------------------------------------------------------------------- #
# parameters (pre-transposed / pre-cast once) and a pure-JAX reference
# --------------------------------------------------------------------------- #
def make_layer_params(key, cin, cout, kernel, *, conv_bias, do_norm, w_scale):
    k1, k2, k3, k4 = jax.random.split(key, 4)
    w_oik = w_scale * jax.random.normal(k1, (cout, cin, kernel), jnp.float32)
    # pre-transpose + pre-reshape + pre-cast ONCE ("state_dict load" time):
    # (Cout, Cin, K) -> (K, Cin, Cout) -> (K*Cin, Cout); bf16 for deep
    # contractions (MXU bf16 path), f32 for the tiny cin==1 layer-0 conv.
    mm_dtype = jnp.bfloat16 if cin >= 128 else jnp.float32
    w_2d = jnp.transpose(w_oik, (2, 1, 0)).reshape(kernel * cin, cout)
    p = {
        'w_2d': w_2d.astype(mm_dtype),
        'w_oik': w_oik,                        # kept only for the pure-JAX ref
    }
    if conv_bias:
        p['b'] = 0.1 * jax.random.normal(k2, (1, cout), jnp.float32)
    if do_norm:
        p['gn_gamma'] = 1.0 + 0.05 * jax.random.normal(k3, (1, cout), jnp.float32)
        p['gn_beta'] = 0.05 * jax.random.normal(k4, (1, cout), jnp.float32)
    return p


def reference_layer(hidden_states, params, *, stride, do_norm, eps=1e-5):
    """Pure-JAX/XLA reference: conv -> (GroupNorm) -> exact GELU (f32)."""
    x = hidden_states[:, :, 0, :]                                  # (B, Cin, T)
    w = params['w_oik']                                            # (Cout,Cin,K)
    k = w.shape[2]
    t = x.shape[-1]
    t_out = (t - k) // stride + 1
    idx = jnp.arange(t_out)[:, None] * stride + jnp.arange(k)[None, :]
    patches = x[:, :, idx]                                         # (B,Cin,To,K)
    y = jnp.einsum('bitk,oik->bot', patches, w,
                   precision=jax.lax.Precision.HIGHEST)
    if 'b' in params:
        y = y + params['b'][0][None, :, None]
    if do_norm:
        mu = jnp.mean(y, axis=2, keepdims=True)
        var = jnp.mean((y - mu) ** 2, axis=2, keepdims=True)
        y = (y - mu) * jax.lax.rsqrt(var + eps)
        y = (y * params['gn_gamma'][0][None, :, None]
             + params['gn_beta'][0][None, :, None])
    y = jax.nn.gelu(y, approximate=False)                          # erf GELU
    return y[:, :, None, :]


# --------------------------------------------------------------------------- #
# demo
# --------------------------------------------------------------------------- #
if __name__ == "__main__":
    key = jax.random.PRNGKey(0)
    kx, kp0, kp1 = jax.random.split(key, 3)

    # Small WavLM-feature-encoder-shaped config:
    #   layer 0: Conv1d(1, C, k=10, s=5, bias=False) + GroupNorm(C, C) + GELU
    #   layer 1: Conv1d(C, C, k=3,  s=2, bias=True)                    + GELU
    B, T, C = 2, 500, 128
    x = jax.random.normal(kx, (B, 1, 1, T), jnp.float32)           # NCHW, H == 1

    p0 = make_layer_params(kp0, 1, C, 10, conv_bias=False, do_norm=True,
                           w_scale=0.5)
    p1 = make_layer_params(kp1, C, C, 3, conv_bias=True, do_norm=False,
                           w_scale=0.05)

    @jax.jit
    def forward(inp_nchw):
        # convert to channels-last ONCE at the model boundary; stacked layers
        # stay in the kernels' native lane-dense channels-last layout.
        h = jnp.transpose(inp_nchw[:, :, 0, :], (0, 2, 1))         # (B, T, 1)
        h = wavlm_feature_encoder_layer_tc(h, p0, stride=5, do_norm=True)
        h = wavlm_feature_encoder_layer_tc(h, p1, stride=2, do_norm=False)
        return jnp.transpose(h, (0, 2, 1))[:, :, None, :]          # NCHW out

    y = jax.block_until_ready(forward(x))

    # pure-JAX (f32) reference check
    r = reference_layer(x, p0, stride=5, do_norm=True)
    r = reference_layer(r, p1, stride=2, do_norm=False)

    t_out0 = (T - 10) // 5 + 1          # 99
    t_out1 = (t_out0 - 3) // 2 + 1      # 49
    assert y.shape == (B, C, 1, t_out1), y.shape
    assert bool(jnp.all(jnp.isfinite(y)))
    err = float(jnp.max(jnp.abs(y - r)))
    scale = float(jnp.max(jnp.abs(r)))
    # bf16 MXU operands (f32 accumulation) for layer 1 -> relative tolerance
    assert err <= 2e-2 * max(scale, 1.0), f"max abs err {err} (scale {scale})"
    print("KERNEL_OK")
</pallas_src>

<mosaic_0001>
module attributes {stable_mosaic.version = 11 : i64} {
  func.func @_conv_gelu_kernel(%arg0: i32, %arg1: i32, %arg2: memref<1x1x104x10xf32, #tpu.memory_space<vmem>>, %arg3: memref<10x128xf32, #tpu.memory_space<vmem>>, %arg4: memref<1x104x128xf32, #tpu.memory_space<vmem>>) attributes {dimension_semantics = [#tpu.dimension_semantics<parallel>, #tpu.dimension_semantics<parallel>], iteration_bounds = array<i64: 2, 1>, scalar_prefetch = 0 : i64, scratch_operands = 0 : i64, tpu.core_type = #tpu.core_type<tc>, window_params = [{transform_indices = @transform_0, window_bounds = array<i64: 1, 1, 104, 10>}, {pipeline_mode = #tpu.pipeline_mode<synchronous>, transform_indices = @transform_1, window_bounds = array<i64: 10, 128>}, {transform_indices = @transform_2, window_bounds = array<i64: 1, 104, 128>}]} {
    %c104_i32 = arith.constant 104 : i32
    %0 = arith.muli %arg1, %c104_i32 : i32
    %1 = tpu.assume_multiple %0, 104 : i32
    %c0 = arith.constant 0 : index
    %c0_0 = arith.constant 0 : index
    %2 = arith.index_cast %1 : i32 to index
    %c0_1 = arith.constant 0 : index
    %3 = vector.load %arg2[%c0, %c0_0, %2, %c0_1] : memref<1x1x104x10xf32, #tpu.memory_space<vmem>>, vector<1x1x104x10xf32>
    %4 = vector.shape_cast %3 : vector<1x1x104x10xf32> to vector<104x10xf32>
    %5 = vector.extract_strided_slice %4 {offsets = [0, 0], sizes = [104, 10], strides = [1, 1]} : vector<104x10xf32> to vector<104x10xf32>
    %c0_2 = arith.constant 0 : index
    %c0_3 = arith.constant 0 : index
    %6 = vector.load %arg3[%c0_2, %c0_3] : memref<10x128xf32, #tpu.memory_space<vmem>>, vector<10x128xf32>
    %cst = arith.constant dense<0.000000e+00> : vector<104x128xf32>
    %7 = tpu.matmul %5, %6, %cst {dimension_numbers = #tpu.dot_dimension_numbers<[1], [0], [0], [1], [0, 0, 1, 1], [], []>} : vector<104x10xf32>, vector<10x128xf32>, vector<104x128xf32> -> vector<104x128xf32>
    %c0_4 = arith.constant 0 : index
    %c0_5 = arith.constant 0 : index
    %c0_6 = arith.constant 0 : index
    %8 = vector.load %arg4[%c0_4, %c0_5, %c0_6] : memref<1x104x128xf32, #tpu.memory_space<vmem>>, vector<1x104x128xf32>
    %9 = vector.shape_cast %8 : vector<1x104x128xf32> to vector<104x128xf32>
    %10 = vector.shape_cast %7 : vector<104x128xf32> to vector<1x104x128xf32>
    tpu.vector_store %arg4[%c0_4, %c0_5, %c0_6], %10 {strides = array<i32>} : memref<1x104x128xf32, #tpu.memory_space<vmem>>, vector<1x104x128xf32>,
    return
  }
  func.func @transform_0(%arg0: i32, %arg1: i32) -> (i32, i32, i32, i32) {
    %c0_i32 = arith.constant 0 : i32
    %c0_i32_0 = arith.constant 0 : i32
    %c0_i32_1 = arith.constant 0 : i32
    %c0_i32_2 = arith.constant 0 : i32
    return %arg0, %c0_i32, %c0_i32_0, %c0_i32_1 : i32, i32, i32, i32
  }
  func.func @transform_1(%arg0: i32, %arg1: i32) -> (i32, i32) {
    %c0_i32 = arith.constant 0 : i32
    %c0_i32_0 = arith.constant 0 : i32
    %c0_i32_1 = arith.constant 0 : i32
    return %c0_i32, %c0_i32_0 : i32, i32
  }
  func.func @transform_2(%arg0: i32, %arg1: i32) -> (i32, i32, i32) {
    %c0_i32 = arith.constant 0 : i32
    %c0_i32_0 = arith.constant 0 : i32
    return %arg0, %arg1, %c0_i32 : i32, i32, i32
  }
}

module attributes {stable_mosaic.version = 11 : i64} {
  func.func @_groupnorm_gelu_kernel(%arg0: i32, %arg1: i32, %arg2: memref<1x104x128xf32, #tpu.memory_space<vmem>>, %arg3: memref<1x128xf32, #tpu.memory_space<vmem>>, %arg4: memref<1x128xf32, #tpu.memory_space<vmem>>, %arg5: memref<1x104x128xf32, #tpu.memory_space<vmem>>) attributes {dimension_semantics = [#tpu.dimension_semantics<parallel>, #tpu.dimension_semantics<parallel>], iteration_bounds = array<i64: 2, 1>, scalar_prefetch = 0 : i64, scratch_operands = 0 : i64, tpu.core_type = #tpu.core_type<tc>, window_params = [{transform_indices = @transform_0, window_bounds = array<i64: 1, 104, 128>}, {transform_indices = @transform_1, window_bounds = array<i64: 1, 128>}, {transform_indices = @transform_2, window_bounds = array<i64: 1, 128>}, {transform_indices = @transform_3, window_bounds = array<i64: 1, 104, 128>}]} {
    %c0 = arith.constant 0 : index
    %c0_0 = arith.constant 0 : index
    %c0_1 = arith.constant 0 : index
    %0 = vector.load %arg2[%c0, %c0_0, %c0_1] : memref<1x104x128xf32, #tpu.memory_space<vmem>>, vector<1x104x128xf32>
    %1 = vector.shape_cast %0 : vector<1x104x128xf32> to vector<104x128xf32>
    %2 = tpu.iota {dimensions = array<i32: 0>} : vector<104x1xi32>
    %c99_i32 = arith.constant 99 : i32
    %3 = vector.broadcast %c99_i32 : i32 to vector<104x1xi32>
    %4 = arith.cmpi slt, %2, %3 : vector<104x1xi32>
    %5 = arith.extui %4 : vector<104x1xi1> to vector<104x1xi32>
    %6 = arith.sitofp %5 : vector<104x1xi32> to vector<104x1xf32>
    %7 = vector.broadcast %6 : vector<104x1xf32> to vector<104x128xf32>
    %8 = arith.mulf %1, %7 : vector<104x128xf32>
    %cst = arith.constant dense<0.000000e+00> : vector<128xf32>
    %9 = vector.multi_reduction <add>, %8, %cst [0] : vector<104x128xf32> to vector<128xf32>
    %10 = vector.shape_cast %9 : vector<128xf32> to vector<1x128xf32>
    %cst_2 = arith.constant 0.0101010101 : f32
    %11 = vector.broadcast %cst_2 : f32 to vector<1x128xf32>
    %12 = arith.mulf %10, %11 : vector<1x128xf32>
    %13 = vector.broadcast %12 : vector<1x128xf32> to vector<104x128xf32>
    %14 = arith.subf %1, %13 : vector<104x128xf32>
    %15 = arith.mulf %14, %14 : vector<104x128xf32>
    %16 = vector.broadcast %6 : vector<104x1xf32> to vector<104x128xf32>
    %17 = arith.mulf %15, %16 : vector<104x128xf32>
    %cst_3 = arith.constant dense<0.000000e+00> : vector<128xf32>
    %18 = vector.multi_reduction <add>, %17, %cst_3 [0] : vector<104x128xf32> to vector<128xf32>
    %19 = vector.shape_cast %18 : vector<128xf32> to vector<1x128xf32>
    %cst_4 = arith.constant 0.0101010101 : f32
    %20 = vector.broadcast %cst_4 : f32 to vector<1x128xf32>
    %21 = arith.mulf %19, %20 : vector<1x128xf32>
    %cst_5 = arith.constant 9.99999974E-6 : f32
    %22 = vector.broadcast %cst_5 : f32 to vector<1x128xf32>
    %23 = arith.addf %21, %22 : vector<1x128xf32>
    %24 = math.rsqrt %23 : vector<1x128xf32>
    %25 = vector.broadcast %24 : vector<1x128xf32> to vector<104x128xf32>
    %26 = arith.mulf %14, %25 : vector<104x128xf32>
    %c0_6 = arith.constant 0 : index
    %c0_7 = arith.constant 0 : index
    %27 = vector.load %arg3[%c0_6, %c0_7] : memref<1x128xf32, #tpu.memory_space<vmem>>, vector<1x128xf32>
    %28 = vector.broadcast %27 : vector<1x128xf32> to vector<104x128xf32>
    %29 = arith.mulf %26, %28 : vector<104x128xf32>
    %c0_8 = arith.constant 0 : index
    %c0_9 = arith.constant 0 : index
    %30 = vector.load %arg4[%c0_8, %c0_9] : memref<1x128xf32, #tpu.memory_space<vmem>>, vector<1x128xf32>
    %31 = vector.broadcast %30 : vector<1x128xf32> to vector<104x128xf32>
    %32 = arith.addf %29, %31 : vector<104x128xf32>
    %cst_10 = arith.constant 5.000000e-01 : f32
    %33 = vector.broadcast %cst_10 : f32 to vector<104x128xf32>
    %34 = arith.mulf %33, %32 : vector<104x128xf32>
    %cst_11 = arith.constant 0.707106769 : f32
    %35 = vector.broadcast %cst_11 : f32 to vector<104x128xf32>
    %36 = arith.mulf %32, %35 : vector<104x128xf32>
    %37 = math.absf %36 : vector<104x128xf32>
    %cst_12 = arith.constant 0.327591091 : f32
    %38 = vector.broadcast %cst_12 : f32 to vector<104x128xf32>
    %39 = arith.mulf %38, %37 : vector<104x128xf32>
    %cst_13 = arith.constant 1.000000e+00 : f32
    %40 = vector.broadcast %cst_13 : f32 to vector<104x128xf32>
    %41 = arith.addf %40, %39 : vector<104x128xf32>
    %42 = tpu.reciprocal %41 {approx = true} : vector<104x128xf32> -> vector<104x128xf32>
    %cst_14 = arith.constant 1.06140542 : f32
    %43 = vector.broadcast %cst_14 : f32 to vector<104x128xf32>
    %44 = arith.mulf %43, %42 : vector<104x128xf32>
    %cst_15 = arith.constant -1.45315206 : f32
    %45 = vector.broadcast %cst_15 : f32 to vector<104x128xf32>
    %46 = arith.addf %44, %45 : vector<104x128xf32>
    %47 = arith.mulf %46, %42 : vector<104x128xf32>
    %cst_16 = arith.constant 1.42141378 : f32
    %48 = vector.broadcast %cst_16 : f32 to vector<104x128xf32>
    %49 = arith.addf %47, %48 : vector<104x128xf32>
    %50 = arith.mulf %49, %42 : vector<104x128xf32>
    %cst_17 = arith.constant -0.284496725 : f32
    %51 = vector.broadcast %cst_17 : f32 to vector<104x128xf32>
    %52 = arith.addf %50, %51 : vector<104x128xf32>
    %53 = arith.mulf %52, %42 : vector<104x128xf32>
    %cst_18 = arith.constant 0.254829586 : f32
    %54 = vector.broadcast %cst_18 : f32 to vector<104x128xf32>
    %55 = arith.addf %53, %54 : vector<104x128xf32>
    %56 = arith.mulf %55, %42 : vector<104x128xf32>
    %cst_19 = arith.constant 0.000000e+00 : f32
    %57 = vector.broadcast %cst_19 : f32 to vector<104x128xf32>
    %58 = arith.subf %57, %37 : vector<104x128xf32>
    %59 = arith.mulf %58, %37 : vector<104x128xf32>
    %60 = math.exp %59 : vector<104x128xf32>
    %61 = arith.mulf %56, %60 : vector<104x128xf32>
    %cst_20 = arith.constant 1.000000e+00 : f32
    %62 = vector.broadcast %cst_20 : f32 to vector<104x128xf32>
    %63 = arith.subf %62, %61 : vector<104x128xf32>
    %cst_21 = arith.constant 0.000000e+00 : f32
    %64 = vector.broadcast %cst_21 : f32 to vector<104x128xf32>
    %65 = arith.cmpf oge, %36, %64 : vector<104x128xf32>
    %cst_22 = arith.constant 0.000000e+00 : f32
    %66 = vector.broadcast %cst_22 : f32 to vector<104x128xf32>
    %67 = arith.subf %66, %63 : vector<104x128xf32>
    %68 = arith.select %65, %63, %67 : vector<104x128xi1>, vector<104x128xf32>
    %cst_23 = arith.constant 1.000000e+00 : f32
    %69 = vector.broadcast %cst_23 : f32 to vector<104x128xf32>
    %70 = arith.addf %69, %68 : vector<104x128xf32>
    %71 = arith.mulf %34, %70 : vector<104x128xf32>
    %c0_24 = arith.constant 0 : index
    %c0_25 = arith.constant 0 : index
    %c0_26 = arith.constant 0 : index
    %72 = vector.load %arg5[%c0_24, %c0_25, %c0_26] : memref<1x104x128xf32, #tpu.memory_space<vmem>>, vector<1x104x128xf32>
    %73 = vector.shape_cast %72 : vector<1x104x128xf32> to vector<104x128xf32>
    %74 = vector.shape_cast %71 : vector<104x128xf32> to vector<1x104x128xf32>
    tpu.vector_store %arg5[%c0_24, %c0_25, %c0_26], %74 {strides = array<i32>} : memref<1x104x128xf32, #tpu.memory_space<vmem>>, vector<1x104x128xf32>,
    return
  }
  func.func @transform_0(%arg0: i32, %arg1: i32) -> (i32, i32, i32) {
    %c0_i32 = arith.constant 0 : i32
    %c0_i32_0 = arith.constant 0 : i32
    return %arg0, %c0_i32, %arg1 : i32, i32, i32
  }
  func.func @transform_1(%arg0: i32, %arg1: i32) -> (i32, i32) {
    %c0_i32 = arith.constant 0 : i32
    %c0_i32_0 = arith.constant 0 : i32
    return %c0_i32, %arg1 : i32, i32
  }
  func.func @transform_2(%arg0: i32, %arg1: i32) -> (i32, i32) {
    %c0_i32 = arith.constant 0 : i32
    %c0_i32_0 = arith.constant 0 : i32
    return %c0_i32, %arg1 : i32, i32
  }
  func.func @transform_3(%arg0: i32, %arg1: i32) -> (i32, i32, i32) {
    %c0_i32 = arith.constant 0 : i32
    %c0_i32_0 = arith.constant 0 : i32
    return %arg0, %c0_i32, %arg1 : i32, i32, i32
  }
}

module attributes {stable_mosaic.version = 11 : i64} {
  func.func @_conv_gelu_kernel(%arg0: i32, %arg1: i32, %arg2: memref<1x2x58x128xbf16, #tpu.memory_space<vmem>>, %arg3: memref<384x128xbf16, #tpu.memory_space<vmem>>, %arg4: memref<1x128xf32, #tpu.memory_space<vmem>>, %arg5: memref<1x56x128xf32, #tpu.memory_space<vmem>>) attributes {dimension_semantics = [#tpu.dimension_semantics<parallel>, #tpu.dimension_semantics<parallel>], iteration_bounds = array<i64: 2, 1>, scalar_prefetch = 0 : i64, scratch_operands = 0 : i64, tpu.core_type = #tpu.core_type<tc>, window_params = [{transform_indices = @transform_0, window_bounds = array<i64: 1, 2, 58, 128>}, {pipeline_mode = #tpu.pipeline_mode<synchronous>, transform_indices = @transform_1, window_bounds = array<i64: 384, 128>}, {pipeline_mode = #tpu.pipeline_mode<synchronous>, transform_indices = @transform_2, window_bounds = array<i64: 1, 128>}, {transform_indices = @transform_3, window_bounds = array<i64: 1, 56, 128>}]} {
    %c56_i32 = arith.constant 56 : i32
    %0 = arith.muli %arg1, %c56_i32 : i32
    %1 = tpu.assume_multiple %0, 56 : i32
    %c0 = arith.constant 0 : index
    %c0_0 = arith.constant 0 : index
    %2 = arith.index_cast %1 : i32 to index
    %c0_1 = arith.constant 0 : index
    %3 = vector.load %arg2[%c0, %c0_0, %2, %c0_1] : memref<1x2x58x128xbf16, #tpu.memory_space<vmem>>, vector<1x1x57x128xbf16>
    %4 = vector.shape_cast %3 : vector<1x1x57x128xbf16> to vector<57x128xbf16>
    %5 = vector.extract_strided_slice %4 {offsets = [0, 0], sizes = [56, 128], strides = [1, 1]} : vector<57x128xbf16> to vector<56x128xbf16>
    %6 = vector.extract_strided_slice %4 {offsets = [1, 0], sizes = [56, 128], strides = [1, 1]} : vector<57x128xbf16> to vector<56x128xbf16>
    %c0_2 = arith.constant 0 : index
    %c1 = arith.constant 1 : index
    %7 = arith.index_cast %1 : i32 to index
    %c0_3 = arith.constant 0 : index
    %8 = vector.load %arg2[%c0_2, %c1, %7, %c0_3] : memref<1x2x58x128xbf16, #tpu.memory_space<vmem>>, vector<1x1x57x128xbf16>
    %9 = vector.shape_cast %8 : vector<1x1x57x128xbf16> to vector<57x128xbf16>
    %10 = vector.extract_strided_slice %9 {offsets = [0, 0], sizes = [56, 128], strides = [1, 1]} : vector<57x128xbf16> to vector<56x128xbf16>
    %11 = tpu.concatenate %5, %10, %6 in 1 : vector<56x128xbf16>, vector<56x128xbf16>, vector<56x128xbf16> -> vector<56x384xbf16>
    %c0_4 = arith.constant 0 : index
    %c0_5 = arith.constant 0 : index
    %12 = vector.load %arg3[%c0_4, %c0_5] : memref<384x128xbf16, #tpu.memory_space<vmem>>, vector<384x128xbf16>
    %cst = arith.constant dense<0.000000e+00> : vector<56x128xf32>
    %13 = tpu.matmul %11, %12, %cst {dimension_numbers = #tpu.dot_dimension_numbers<[1], [0], [0], [1], [0, 0, 1, 1], [], []>} : vector<56x384xbf16>, vector<384x128xbf16>, vector<56x128xf32> -> vector<56x128xf32>
    %c0_6 = arith.constant 0 : index
    %c0_7 = arith.constant 0 : index
    %14 = vector.load %arg4[%c0_6, %c0_7] : memref<1x128xf32, #tpu.memory_space<vmem>>, vector<1x128xf32>
    %15 = vector.broadcast %14 : vector<1x128xf32> to vector<56x128xf32>
    %16 = arith.addf %13, %15 : vector<56x128xf32>
    %cst_8 = arith.constant 5.000000e-01 : f32
    %17 = vector.broadcast %cst_8 : f32 to vector<56x128xf32>
    %18 = arith.mulf %17, %16 : vector<56x128xf32>
    %cst_9 = arith.constant 0.707106769 : f32
    %19 = vector.broadcast %cst_9 : f32 to vector<56x128xf32>
    %20 = arith.mulf %16, %19 : vector<56x128xf32>
    %21 = math.absf %20 : vector<56x128xf32>
    %cst_10 = arith.constant 0.327591091 : f32
    %22 = vector.broadcast %cst_10 : f32 to vector<56x128xf32>
    %23 = arith.mulf %22, %21 : vector<56x128xf32>
    %cst_11 = arith.constant 1.000000e+00 : f32
    %24 = vector.broadcast %cst_11 : f32 to vector<56x128xf32>
    %25 = arith.addf %24, %23 : vector<56x128xf32>
    %26 = tpu.reciprocal %25 {approx = true} : vector<56x128xf32> -> vector<56x128xf32>
    %cst_12 = arith.constant 1.06140542 : f32
    %27 = vector.broadcast %cst_12 : f32 to vector<56x128xf32>
    %28 = arith.mulf %27, %26 : vector<56x128xf32>
    %cst_13 = arith.constant -1.45315206 : f32
    %29 = vector.broadcast %cst_13 : f32 to vector<56x128xf32>
    %30 = arith.addf %28, %29 : vector<56x128xf32>
    %31 = arith.mulf %30, %26 : vector<56x128xf32>
    %cst_14 = arith.constant 1.42141378 : f32
    %32 = vector.broadcast %cst_14 : f32 to vector<56x128xf32>
    %33 = arith.addf %31, %32 : vector<56x128xf32>
    %34 = arith.mulf %33, %26 : vector<56x128xf32>
    %cst_15 = arith.constant -0.284496725 : f32
    %35 = vector.broadcast %cst_15 : f32 to vector<56x128xf32>
    %36 = arith.addf %34, %35 : vector<56x128xf32>
    %37 = arith.mulf %36, %26 : vector<56x128xf32>
    %cst_16 = arith.constant 0.254829586 : f32
    %38 = vector.broadcast %cst_16 : f32 to vector<56x128xf32>
    %39 = arith.addf %37, %38 : vector<56x128xf32>
    %40 = arith.mulf %39, %26 : vector<56x128xf32>
    %cst_17 = arith.constant 0.000000e+00 : f32
    %41 = vector.broadcast %cst_17 : f32 to vector<56x128xf32>
    %42 = arith.subf %41, %21 : vector<56x128xf32>
    %43 = arith.mulf %42, %21 : vector<56x128xf32>
    %44 = math.exp %43 : vector<56x128xf32>
    %45 = arith.mulf %40, %44 : vector<56x128xf32>
    %cst_18 = arith.constant 1.000000e+00 : f32
    %46 = vector.broadcast %cst_18 : f32 to vector<56x128xf32>
    %47 = arith.subf %46, %45 : vector<56x128xf32>
    %cst_19 = arith.constant 0.000000e+00 : f32
    %48 = vector.broadcast %cst_19 : f32 to vector<56x128xf32>
    %49 = arith.cmpf oge, %20, %48 : vector<56x128xf32>
    %cst_20 = arith.constant 0.000000e+00 : f32
    %50 = vector.broadcast %cst_20 : f32 to vector<56x128xf32>
    %51 = arith.subf %50, %47 : vector<56x128xf32>
    %52 = arith.select %49, %47, %51 : vector<56x128xi1>, vector<56x128xf32>
    %cst_21 = arith.constant 1.000000e+00 : f32
    %53 = vector.broadcast %cst_21 : f32 to vector<56x128xf32>
    %54 = arith.addf %53, %52 : vector<56x128xf32>
    %55 = arith.mulf %18, %54 : vector<56x128xf32>
    %c0_22 = arith.constant 0 : index
    %c0_23 = arith.constant 0 : index
    %c0_24 = arith.constant 0 : index
    %56 = vector.load %arg5[%c0_22, %c0_23, %c0_24] : memref<1x56x128xf32, #tpu.memory_space<vmem>>, vector<1x56x128xf32>
    %57 = vector.shape_cast %56 : vector<1x56x128xf32> to vector<56x128xf32>
    %58 = vector.shape_cast %55 : vector<56x128xf32> to vector<1x56x128xf32>
    tpu.vector_store %arg5[%c0_22, %c0_23, %c0_24], %58 {strides = array<i32>} : memref<1x56x128xf32, #tpu.memory_space<vmem>>, vector<1x56x128xf32>,
    return
  }
  func.func @transform_0(%arg0: i32, %arg1: i32) -> (i32, i32, i32, i32) {
    %c0_i32 = arith.constant 0 : i32
    %c0_i32_0 = arith.constant 0 : i32
    %c0_i32_1 = arith.constant 0 : i32
    %c0_i32_2 = arith.constant 0 : i32
    return %arg0, %c0_i32, %c0_i32_0, %c0_i32_1 : i32, i32, i32, i32
  }
  func.func @transform_1(%arg0: i32, %arg1: i32) -> (i32, i32) {
    %c0_i32 = arith.constant 0 : i32
    %c0_i32_0 = arith.constant 0 : i32
    %c0_i32_1 = arith.constant 0 : i32
    return %c0_i32, %c0_i32_0 : i32, i32
  }
  func.func @transform_2(%arg0: i32, %arg1: i32) -> (i32, i32) {
    %c0_i32 = arith.constant 0 : i32
    %c0_i32_0 = arith.constant 0 : i32
    %c0_i32_1 = arith.constant 0 : i32
    return %c0_i32, %c0_i32_0 : i32, i32
  }
  func.func @transform_3(%arg0: i32, %arg1: i32) -> (i32, i32, i32) {
    %c0_i32 = arith.constant 0 : i32
    %c0_i32_0 = arith.constant 0 : i32
    return %arg0, %arg1, %c0_i32 : i32, i32, i32
  }
}

</mosaic_0001>

<llo_original>
// kernel: forward.3
$region0: #{forward.3}
  #allocation0 [shape = 'u32[]', space=smem, size = 0x4, offset = 0x4, fixed_abs, tag = 'smem constant byte address 0x4 - core index']
  #allocation1 [shape = 'u32[144,128]{1,0:T(1,128)}', space=vmem, size = 0x12000, scoped, tag = 'internal scratch']
  %s0 = inlined_call_operand.vmem [shape: f32[2,1,104,10], index: 0, kind: input, shape index: {}]
  %s1 = inlined_call_operand.vmem [shape: f32[10,128], index: 1, kind: input, shape index: {}]
  %s2 = inlined_call_operand.vmem [shape: f32[2,104,128], index: 2, kind: output, shape index: {}]
  %s3 = sld [smem:[#allocation0]]
  $region41: #{forward.3} parent=0
    _
  %s5 = ssub.s32 1, %s3
  %s6 = scalar_select 0, %s5, %s3
  loop: start=0, step=1, limit=4
  $region2: #{forward.3} parent=0 // loop_pre_header
    _
  $region3: #{forward.3} parent=0 // loop_header
    %s8 = sphi 0, %s12
    %p9 = scmp.ge.s32.totalorder %s8, 4
    %s15 = sphi 0, %s27
    %s16 = sphi 0, %s23
    %s17 = sphi 0, %s15
    %s18 = sphi 0, %s16
    %s19 = sphi 0, %s17
    %s20 = sphi 0, %s18
    %s30 = sphi 0, %s32
    %s33 = sphi 0, %s30
    %s34 = sphi 0, %s33
    %s50 = sphi 0, %s34
    %s54 = sphi 0, %s54
    %s56 = sphi 0, %s54
    %s57 = sphi 0, %s56
    %s71 = sphi 0, %s57
    %s79 = sphi 0, %s81
    %s82 = sphi 0, %s79
    %s83 = sphi 0, %s82
    %s99 = sphi 0, %s83
  $region4: #{forward.3} parent=0 // loop_header_branch
    %11 = sbr.rel (%p9) target = $region8
  $region5: #{forward.3} parent=0 // loop_body
    %s13 = ssub.s32 %s8, 1
    %s14 = ssub.s32 %s8, 2
    %s21 = sadd.s32 1, %s16
    %p22 = scmp.ge.s32.totalorder %s21, 1
    %s23 = scalar_select %p22, 0, %s21
    %s24 = sadd.s32 1, %s15
    %s25 = scalar_select %p22, %s24, %s15
    %p26 = scmp.ge.s32.totalorder %s25, 2
    %s27 = scalar_select %p26, 0, %s25
    %s28 = ssub.s32 %s15, %s27
    %p29 = scmp.eq.s32.totalorder %s28, 0
    %s31 = sadd.s32 %s30, 1
    %s32 = scalar_select %p29, %s30, %s31
    %p35 = pneg %p29
    %p36 = scmp.eq.s32.totalorder %s8, 1
    %p37 = por %p35, %p36
    %p38 = scmp.ne.s32.totalorder %s30, %s33
    %p39 = scmp.eq.s32.totalorder %s8, 0
    %p40 = por %p38, %p39
    %p41 = scmp.ne.s32.totalorder %s30, %s33
    %p42 = scmp.eq.s32.totalorder %s13, 1
    %p43 = por %p41, %p42
    %p44 = scmp.ne.s32.totalorder %s33, %s34
    %p45 = scmp.eq.s32.totalorder %s13, 0
    %p46 = por %p44, %p45
    %p47 = scmp.ne.s32.totalorder %s33, %s34
    %p48 = scmp.eq.s32.totalorder %s14, 1
    %p49 = por %p47, %p48
    %p51 = scmp.ne.s32.totalorder %s34, %s50
    %p52 = scmp.eq.s32.totalorder %s14, 0
    %p53 = por %p51, %p52
    %s55 = sadd.s32 %s54, 1
    %p58 = scmp.eq.s32.totalorder %s8, 1
    %p59 = scmp.ne.s32.totalorder %s54, %s56
    %p60 = scmp.eq.s32.totalorder %s8, 0
    %p61 = por %p59, %p60
    %p62 = scmp.ne.s32.totalorder %s54, %s56
    %p63 = scmp.eq.s32.totalorder %s13, 1
    %p64 = por %p62, %p63
    %p65 = scmp.ne.s32.totalorder %s56, %s57
    %p66 = scmp.eq.s32.totalorder %s13, 0
    %p67 = por %p65, %p66
    %p68 = scmp.ne.s32.totalorder %s56, %s57
    %p69 = scmp.eq.s32.totalorder %s14, 1
    %p70 = por %p68, %p69
    %p72 = scmp.ne.s32.totalorder %s57, %s71
    %p73 = scmp.eq.s32.totalorder %s14, 0
    %p74 = por %p72, %p73
    %s75 = ssub.s32 %s15, %s27
    %s76 = ssub.s32 %s16, %s23
    %s77 = sor.u32 %s75, %s76
    %p78 = scmp.eq.s32.totalorder %s77, 0
    %s80 = sadd.s32 %s79, 1
    %s81 = scalar_select %p78, %s79, %s80
    %p84 = pneg %p78
    %p85 = scmp.eq.s32.totalorder %s8, 1
    %p86 = por %p84, %p85
    %p87 = scmp.ne.s32.totalorder %s79, %s82
    %p88 = scmp.eq.s32.totalorder %s8, 0
    %p89 = por %p87, %p88
    %p90 = scmp.ne.s32.totalorder %s79, %s82
    %p91 = scmp.eq.s32.totalorder %s13, 1
    %p92 = por %p90, %p91
    %p93 = scmp.ne.s32.totalorder %s82, %s83
    %p94 = scmp.eq.s32.totalorder %s13, 0
    %p95 = por %p93, %p94
    %p96 = scmp.ne.s32.totalorder %s82, %s83
    %p97 = scmp.eq.s32.totalorder %s14, 1
    %p98 = por %p96, %p97
    %p100 = scmp.ne.s32.totalorder %s83, %s99
    %p101 = scmp.eq.s32.totalorder %s14, 0
    %p102 = por %p100, %p101
    %p103 = scmp.le.s32.totalorder 1, %s8
    %p104 = scmp.lt.s32.totalorder %s8, 3
    %p105 = pnand %p103, %p104
    %p106 = pneg %p105
    // Predicated region
    $region9: #{forward.3} parent=5 // pred_check
      _
    $region10: #{forward.3} parent=5 // pred_check_branch
      %108 = sbr.rel (%p105) target = $region12
    $region11: #{forward.3} parent=5 // pred_region
      %s109 = ssub.s32 %s8, 1
      // Predicated region
      $region13: #{forward.3} parent=11 // pred_check
        %p110 = pneg %p67
      $region14: #{forward.3} parent=11 // pred_check_branch
        %112 = sbr.rel (%p110) target = $region16
      $region15: #{forward.3} parent=11 // pred_region
        _
      $region16: #{forward.3} parent=11 // pred_fallthru
        _
    $region12: #{forward.3} parent=5 // pred_fallthru
      _
    %p113 = scmp.lt.s32.totalorder %s8, 2
    // Predicated region
    $region17: #{forward.3} parent=5 // pred_check
      %p114 = pneg %p113
    $region18: #{forward.3} parent=5 // pred_check_branch
      %116 = sbr.rel (%p114) target = $region20
    $region19: #{forward.3} parent=5 // pred_region
      // Predicated region
      $region21: #{forward.3} parent=19 // pred_check
        %p117 = pneg %p40
      $region22: #{forward.3} parent=19 // pred_check_branch
        %119 = sbr.rel (%p117) target = $region24
      $region23: #{forward.3} parent=19 // pred_region
        %p120 = scmp.lt.s32.totalorder %s15, 1
        %s121 = scalar_select %p120, %s15, 1
        %s122 = smul.addr %s121, 13
        %s123 = smul.addr %s122, 8
        %s124 = scalar_lea.vmem %s0, %s123
      $region24: #{forward.3} parent=19 // pred_fallthru
        _
    $region20: #{forward.3} parent=5 // pred_fallthru
      _
    %p125 = scmp.le.s32.totalorder 1, %s8
    %p126 = scmp.lt.s32.totalorder %s8, 3
    %p127 = pnand %p125, %p126
    %p128 = pneg %p127
    // Predicated region
    $region25: #{forward.3} parent=5 // pred_check
      _
    $region26: #{forward.3} parent=5 // pred_check_branch
      %130 = sbr.rel (%p127) target = $region28
    $region27: #{forward.3} parent=5 // pred_region
      %s131 = ssub.s32 %s8, 1
      %p132 = scmp.lt.s32.totalorder %s17, 1
      %s133 = scalar_select %p132, %s17, 1
      %s134 = smul.addr %s133, 13
      %s135 = smul.addr %s134, 8
      %s136 = scalar_lea.vmem %s0, %s135
      %p137 = pneg %p46
      %p138 = pneg %p43
      %p139 = pneg %p67
      %p140 = pneg %p64
      %p141 = pneg %p95
      %p142 = pneg %p92
      %s143 = smul.u32 13, %s18
      %p144 = scmp.lt.s32.totalorder %s17, 1
      %s145 = scalar_select %p144, %s17, 1
      %p146 = scmp.lt.s32.totalorder %s143, 12
      %s147 = scalar_select %p146, %s143, 12
      %s148 = smul.addr %s145, 13
      %s149 = sadd.s32 %s147, %s148
      %s150 = smul.addr %s149, 8
      %s151 = scalar_lea.vmem %s2, %s150
      %p152 = scmp.lt.s32.totalorder %s17, 1
      %s153 = scalar_select %p152, %s17, 1
      %s154 = smul.addr %s153, 13
      %s155 = smul.addr %s154, 8
      %s156 = scalar_lea.vmem %s0, %s155
      %s157 = smul.u32 13, %s18
      %p158 = scmp.lt.s32.totalorder %s17, 1
      %s159 = scalar_select %p158, %s17, 1
      %p160 = scmp.lt.s32.totalorder %s157, 12
      %s161 = scalar_select %p160, %s157, 12
      %s162 = smul.addr %s159, 13
      %s163 = sadd.s32 %s161, %s162
      %s164 = smul.addr %s163, 8
      %s165 = scalar_lea.vmem %s2, %s164
      %s166 = smul.u32 13, %s18
      %s167 = smul.u32 %s18, 104
      %s168 = scalar_lea.vmem %s156, %s167
      %v169 = vld [vmem:[%s168] sm:$0xff]
      %v170 = vld [vmem:[%s168 + $0x8] sm:$0xff]
      %v171 = vld [vmem:[%s168 + $0x10] sm:$0xff]
      %v172 = vld [vmem:[%s168 + $0x18] sm:$0xff]
      %v173 = vld [vmem:[%s168 + $0x20] sm:$0xff]
      %v174 = vld [vmem:[%s168 + $0x28] sm:$0xff]
      %v175 = vld [vmem:[%s168 + $0x30] sm:$0xff]
      %v176 = vld [vmem:[%s168 + $0x38] sm:$0xff]
      %v177 = vld [vmem:[%s168 + $0x40] sm:$0xff]
      %v178 = vld [vmem:[%s168 + $0x48] sm:$0xff]
      %v179 = vld [vmem:[%s168 + $0x50] sm:$0xff]
      %v180 = vld [vmem:[%s168 + $0x58] sm:$0xff]
      %v181 = vld [vmem:[%s168 + $0x60] sm:$0xff]
      %v182 = vld [vmem:[%s1] sm:$0xff]
      %v183 = vld [vmem:[%s1 + $0x8] sm:$0x3]
      %vm184 = vcmask 80896
      %v186 = vsel %vm184, %v169, 0
      %v189 = vsel %vm184, %v170, 0
      %v192 = vsel %vm184, %v171, 0
      %v195 = vsel %vm184, %v172, 0
      %v198 = vsel %vm184, %v173, 0
      %v201 = vsel %vm184, %v174, 0
      %v204 = vsel %vm184, %v175, 0
      %v207 = vsel %vm184, %v176, 0
      %v210 = vsel %vm184, %v177, 0
      %v213 = vsel %vm184, %v178, 0
      %v216 = vsel %vm184, %v179, 0
      %v219 = vsel %vm184, %v180, 0
      %v222 = vsel %vm184, %v181, 0
      %vm224 = vcmask 1041408
      %v226 = vsel %vm224, %v183, 0
      %228 = vmatprep.subr.mxu0 0.0
      %229 = vmatpush1.msra.mxu0 %v182
      %230 = vmatprep.subr.mxu0 0.0
      %231 = vmatpush1.msra.mxu0 %v226
      %232 = vmatprep.subr.mxu0 0.0
      %233 = vmatpush1.msra.mxu0 0.0
      %234 = vmatprep.subr.mxu0 0.0
      %235 = vmatpush1.msra.mxu0 0.0
      %236 = vmatprep.subr.mxu0 0.0
      %237 = vmatpush1.msra.mxu0 0.0
      %238 = vmatprep.subr.mxu0 0.0
      %239 = vmatpush1.msra.mxu0 0.0
      %240 = vmatprep.subr.mxu0 0.0
      %241 = vmatpush1.msra.mxu0 0.0
      %242 = vmatprep.subr.mxu0 0.0
      %243 = vmatpush1.msra.mxu0 0.0
      %244 = vmatprep.subr.mxu0 0.0
      %245 = vmatpush1.msra.mxu0 0.0
      %246 = vmatprep.subr.mxu0 0.0
      %247 = vmatpush1.msra.mxu0 0.0
      %248 = vmatprep.subr.mxu0 0.0
      %249 = vmatpush1.msra.mxu0 0.0
      %250 = vmatprep.subr.mxu0 0.0
      %251 = vmatpush1.msra.mxu0 0.0
      %252 = vmatprep.subr.mxu0 0.0
      %253 = vmatpush1.msra.mxu0 0.0
      %254 = vmatprep.subr.mxu0 0.0
      %255 = vmatpush1.msra.mxu0 0.0
      %256 = vmatprep.subr.mxu0 0.0
      %257 = vmatpush1.msra.mxu0 0.0
      %258 = vmatprep.subr.mxu0 0.0
      %259 = vmatpush1.msra.mxu0 0.0
      %260 = vmatprep.subr.mxu0 0.0
      %261 = vmatpush1.msra.mxu0 0.0
      %262 = vmatprep.subr.mxu0 0.0
      %263 = vmatpush1.msra.mxu0 0.0
      %264 = vmatprep.subr.mxu0 0.0
      %265 = vmatpush1.msra.mxu0 0.0
      %266 = vmatprep.subr.mxu0 0.0
      %267 = vmatpush1.msra.mxu0 0.0
      %268 = vmatprep.subr.mxu0 0.0
      %269 = vmatpush1.msra.mxu0 0.0
      %270 = vmatprep.subr.mxu0 0.0
      %271 = vmatpush1.msra.mxu0 0.0
      %272 = vmatprep.subr.mxu0 0.0
      %273 = vmatpush1.msra.mxu0 0.0
      %274 = vmatprep.subr.mxu0 0.0
      %275 = vmatpush1.msra.mxu0 0.0
      %276 = vmatprep.subr.mxu0 0.0
      %277 = vmatpush1.msra.mxu0 0.0
      %278 = vmatprep.subr.mxu0 0.0
      %279 = vmatpush1.msra.mxu0 0.0
      %280 = vmatprep.subr.mxu0 0.0
      %281 = vmatpush1.msra.mxu0 0.0
      %282 = vmatprep.subr.mxu0 0.0
      %283 = vmatpush1.msra.mxu0 0.0
      %284 = vmatprep.subr.mxu0 0.0
      %285 = vmatpush1.msra.mxu0 0.0
      %286 = vmatprep.subr.mxu0 0.0
      %287 = vmatpush1.msra.mxu0 0.0
      %288 = vmatprep.subr.mxu0 0.0
      %289 = vmatpush1.msra.mxu0 0.0
      %290 = vmatprep.subr.mxu0 0.0
      %291 = vmatpush1.msra.mxu0 0.0
      %292 = vmatprep.mubr.f32.mxu0 0.0
      %293 = vmatmul.mubr.f32.gmra.mrb[0].mxu0 %v186
      %v294 = vpop.f32.mrb[0].mxu0
      %v295 = vadd.f32 0.0, %v294
      %v296 = vpop.f32.mrb[0].mxu0
      %297 = vmatprep.mubr.f32.mxu0 0.0
      %298 = vmatmul.mubr.f32.gmra.mrb[0].mxu0 %v189
      %v299 = vpop.f32.mrb[0].mxu0
      %v300 = vadd.f32 0.0, %v299
      %v301 = vpop.f32.mrb[0].mxu0
      %302 = vmatprep.mubr.f32.mxu0 0.0
      %303 = vmatmul.mubr.f32.gmra.mrb[0].mxu0 %v192
      %v304 = vpop.f32.mrb[0].mxu0
      %v305 = vadd.f32 0.0, %v304
      %v306 = vpop.f32.mrb[0].mxu0
      %307 = vmatprep.mubr.f32.mxu0 0.0
      %308 = vmatmul.mubr.f32.gmra.mrb[0].mxu0 %v195
      %v309 = vpop.f32.mrb[0].mxu0
      %v310 = vadd.f32 0.0, %v309
      %v311 = vpop.f32.mrb[0].mxu0
      %312 = vmatprep.mubr.f32.mxu0 0.0
      %313 = vmatmul.mubr.f32.gmra.mrb[0].mxu0 %v198
      %v314 = vpop.f32.mrb[0].mxu0
      %v315 = vadd.f32 0.0, %v314
      %v316 = vpop.f32.mrb[0].mxu0
      %317 = vmatprep.mubr.f32.mxu0 0.0
      %318 = vmatmul.mubr.f32.gmra.mrb[0].mxu0 %v201
      %v319 = vpop.f32.mrb[0].mxu0
      %v320 = vadd.f32 0.0, %v319
      %v321 = vpop.f32.mrb[0].mxu0
      %322 = vmatprep.mubr.f32.mxu0 0.0
      %323 = vmatmul.mubr.f32.gmra.mrb[0].mxu0 %v204
      %v324 = vpop.f32.mrb[0].mxu0
      %v325 = vadd.f32 0.0, %v324
      %v326 = vpop.f32.mrb[0].mxu0
      %327 = vmatprep.mubr.f32.mxu0 0.0
      %328 = vmatmul.mubr.f32.gmra.mrb[0].mxu0 %v207
      %v329 = vpop.f32.mrb[0].mxu0
      %v330 = vadd.f32 0.0, %v329
      %v331 = vpop.f32.mrb[0].mxu0
      %332 = vmatprep.mubr.f32.mxu0 0.0
      %333 = vmatmul.mubr.f32.gmra.mrb[0].mxu0 %v210
      %v334 = vpop.f32.mrb[0].mxu0
      %v335 = vadd.f32 0.0, %v334
      %v336 = vpop.f32.mrb[0].mxu0
      %337 = vmatprep.mubr.f32.mxu0 0.0
      %338 = vmatmul.mubr.f32.gmra.mrb[0].mxu0 %v213
      %v339 = vpop.f32.mrb[0].mxu0
      %v340 = vadd.f32 0.0, %v339
      %v341 = vpop.f32.mrb[0].mxu0
      %342 = vmatprep.mubr.f32.mxu0 0.0
      %343 = vmatmul.mubr.f32.gmra.mrb[0].mxu0 %v216
      %v344 = vpop.f32.mrb[0].mxu0
      %v345 = vadd.f32 0.0, %v344
      %v346 = vpop.f32.mrb[0].mxu0
      %347 = vmatprep.mubr.f32.mxu0 0.0
      %348 = vmatmul.mubr.f32.gmra.mrb[0].mxu0 %v219
      %v349 = vpop.f32.mrb[0].mxu0
      %v350 = vadd.f32 0.0, %v349
      %v351 = vpop.f32.mrb[0].mxu0
      %352 = vmatprep.mubr.f32.mxu0 0.0
      %353 = vmatmul.mubr.f32.gmra.mrb[0].mxu0 %v222
      %v354 = vpop.f32.mrb[0].mxu0
      %v355 = vadd.f32 0.0, %v354
      %v356 = vpop.f32.mrb[0].mxu0
      %357 = vdwg.mxu0
      %358 = vst [vmem:[%s165] sm:$0xff] %v295
      %359 = vst [vmem:[%s165 + $0x8] sm:$0xff] %v300
      %360 = vst [vmem:[%s165 + $0x10] sm:$0xff] %v305
      %361 = vst [vmem:[%s165 + $0x18] sm:$0xff] %v310
      %362 = vst [vmem:[%s165 + $0x20] sm:$0xff] %v315
      %363 = vst [vmem:[%s165 + $0x28] sm:$0xff] %v320
      %364 = vst [vmem:[%s165 + $0x30] sm:$0xff] %v325
      %365 = vst [vmem:[%s165 + $0x38] sm:$0xff] %v330
      %366 = vst [vmem:[%s165 + $0x40] sm:$0xff] %v335
      %367 = vst [vmem:[%s165 + $0x48] sm:$0xff] %v340
      %368 = vst [vmem:[%s165 + $0x50] sm:$0xff] %v345
      %369 = vst [vmem:[%s165 + $0x58] sm:$0xff] %v350
      %370 = vst [vmem:[%s165 + $0x60] sm:$0xff] %v355
      %s371 = smul.u32 13, %s18
      %p372 = scmp.lt.s32.totalorder %s17, 1
      %s373 = scalar_select %p372, %s17, 1
      %p374 = scmp.lt.s32.totalorder %s371, 12
      %s375 = scalar_select %p374, %s371, 12
      %s376 = smul.addr %s373, 13
      %s377 = sadd.s32 %s375, %s376
      %s378 = smul.addr %s377, 8
      %s379 = scalar_lea.vmem %s2, %s378
      // Predicated region
      $region29: #{forward.3} parent=27 // pred_check
        %p380 = pneg %p92
      $region30: #{forward.3} parent=27 // pred_check_branch
        %382 = sbr.rel (%p380) target = $region32
      $region31: #{forward.3} parent=27 // pred_region
        %s383 = smul.u32 13, %s18
      $region32: #{forward.3} parent=27 // pred_fallthru
        _
    $region28: #{forward.3} parent=5 // pred_fallthru
      _
    %p384 = scmp.le.s32.totalorder 2, %s8
    // Predicated region
    $region33: #{forward.3} parent=5 // pred_check
      %p385 = pneg %p384
    $region34: #{forward.3} parent=5 // pred_check_branch
      %387 = sbr.rel (%p385) target = $region36
    $region35: #{forward.3} parent=5 // pred_region
      %s388 = ssub.s32 %s8, 2
      // Predicated region
      $region37: #{forward.3} parent=35 // pred_check
        %p389 = pneg %p98
      $region38: #{forward.3} parent=35 // pred_check_branch
        %391 = sbr.rel (%p389) target = $region40
      $region39: #{forward.3} parent=35 // pred_region
        %s392 = smul.u32 13, %s20
        %p393 = scmp.lt.s32.totalorder %s19, 1
        %s394 = scalar_select %p393, %s19, 1
        %p395 = scmp.lt.s32.totalorder %s392, 12
        %s396 = scalar_select %p395, %s392, 12
        %s397 = smul.addr %s394, 13
        %s398 = sadd.s32 %s396, %s397
        %s399 = smul.addr %s398, 8
        %s400 = scalar_lea.vmem %s2, %s399
      $region40: #{forward.3} parent=35 // pred_fallthru
        _
    $region36: #{forward.3} parent=5 // pred_fallthru
      _
  $region6: #{forward.3} parent=0 // loop_footer
    %s12 = sadd.s32 1, %s8
  $region7: #{forward.3} parent=0 // loop_footer_branch
    %7 = sbr.rel target = $region3
  $region8: #{forward.3} parent=0 // loop_exit
    _

// kernel: forward.4
$region0: #{forward.4}
  #allocation0 [shape = 'u32[]', space=smem, size = 0x4, offset = 0x4, fixed_abs, tag = 'smem constant byte address 0x4 - core index']
  #allocation1 [shape = 'u32[144,128]{1,0:T(1,128)}', space=vmem, size = 0x12000, scoped, tag = 'internal scratch']
  %s0 = inlined_call_operand.vmem [shape: f32[2,104,128], index: 0, kind: input, shape index: {}]
  %s1 = inlined_call_operand.vmem [shape: f32[1,128], index: 1, kind: input, shape index: {}]
  %s2 = inlined_call_operand.vmem [shape: f32[1,128], index: 2, kind: input, shape index: {}]
  %s3 = inlined_call_operand.vmem [shape: f32[2,104,128], index: 3, kind: output, shape index: {}]
  %s4 = sld [smem:[#allocation0]]
  $region45: #{forward.4} parent=0
    _
  %s6 = ssub.s32 1, %s4
  %s7 = scalar_select 0, %s6, %s4
  loop: start=0, step=1, limit=4
  $region2: #{forward.4} parent=0 // loop_pre_header
    _
  $region3: #{forward.4} parent=0 // loop_header
    %s9 = sphi 0, %s13
    %p10 = scmp.ge.s32.totalorder %s9, 4
    %s16 = sphi 0, %s28
    %s17 = sphi 0, %s24
    %s18 = sphi 0, %s16
    %s19 = sphi 0, %s17
    %s20 = sphi 0, %s18
    %s21 = sphi 0, %s19
    %s33 = sphi 0, %s35
    %s36 = sphi 0, %s33
    %s37 = sphi 0, %s36
    %s53 = sphi 0, %s37
    %s59 = sphi 0, %s61
    %s62 = sphi 0, %s59
    %s63 = sphi 0, %s62
    %s79 = sphi 0, %s63
    %s85 = sphi 0, %s87
    %s88 = sphi 0, %s85
    %s89 = sphi 0, %s88
    %s105 = sphi 0, %s89
    %s113 = sphi 0, %s115
    %s116 = sphi 0, %s113
    %s117 = sphi 0, %s116
    %s133 = sphi 0, %s117
  $region4: #{forward.4} parent=0 // loop_header_branch
    %12 = sbr.rel (%p10) target = $region8
  $region5: #{forward.4} parent=0 // loop_body
    %s14 = ssub.s32 %s9, 1
    %s15 = ssub.s32 %s9, 2
    %s22 = sadd.s32 1, %s17
    %p23 = scmp.ge.s32.totalorder %s22, 1
    %s24 = scalar_select %p23, 0, %s22
    %s25 = sadd.s32 1, %s16
    %s26 = scalar_select %p23, %s25, %s16
    %p27 = scmp.ge.s32.totalorder %s26, 2
    %s28 = scalar_select %p27, 0, %s26
    %s29 = ssub.s32 %s16, %s28
    %s30 = ssub.s32 %s17, %s24
    %s31 = sor.u32 %s29, %s30
    %p32 = scmp.eq.s32.totalorder %s31, 0
    %s34 = sadd.s32 %s33, 1
    %s35 = scalar_select %p32, %s33, %s34
    %p38 = pneg %p32
    %p39 = scmp.eq.s32.totalorder %s9, 1
    %p40 = por %p38, %p39
    %p41 = scmp.ne.s32.totalorder %s33, %s36
    %p42 = scmp.eq.s32.totalorder %s9, 0
    %p43 = por %p41, %p42
    %p44 = scmp.ne.s32.totalorder %s33, %s36
    %p45 = scmp.eq.s32.totalorder %s14, 1
    %p46 = por %p44, %p45
    %p47 = scmp.ne.s32.totalorder %s36, %s37
    %p48 = scmp.eq.s32.totalorder %s14, 0
    %p49 = por %p47, %p48
    %p50 = scmp.ne.s32.totalorder %s36, %s37
    %p51 = scmp.eq.s32.totalorder %s15, 1
    %p52 = por %p50, %p51
    %p54 = scmp.ne.s32.totalorder %s37, %s53
    %p55 = scmp.eq.s32.totalorder %s15, 0
    %p56 = por %p54, %p55
    %s57 = ssub.s32 %s17, %s24
    %p58 = scmp.eq.s32.totalorder %s57, 0
    %s60 = sadd.s32 %s59, 1
    %s61 = scalar_select %p58, %s59, %s60
    %p64 = pneg %p58
    %p65 = scmp.eq.s32.totalorder %s9, 1
    %p66 = por %p64, %p65
    %p67 = scmp.ne.s32.totalorder %s59, %s62
    %p68 = scmp.eq.s32.totalorder %s9, 0
    %p69 = por %p67, %p68
    %p70 = scmp.ne.s32.totalorder %s59, %s62
    %p71 = scmp.eq.s32.totalorder %s14, 1
    %p72 = por %p70, %p71
    %p73 = scmp.ne.s32.totalorder %s62, %s63
    %p74 = scmp.eq.s32.totalorder %s14, 0
    %p75 = por %p73, %p74
    %p76 = scmp.ne.s32.totalorder %s62, %s63
    %p77 = scmp.eq.s32.totalorder %s15, 1
    %p78 = por %p76, %p77
    %p80 = scmp.ne.s32.totalorder %s63, %s79
    %p81 = scmp.eq.s32.totalorder %s15, 0
    %p82 = por %p80, %p81
    %s83 = ssub.s32 %s17, %s24
    %p84 = scmp.eq.s32.totalorder %s83, 0
    %s86 = sadd.s32 %s85, 1
    %s87 = scalar_select %p84, %s85, %s86
    %p90 = pneg %p84
    %p91 = scmp.eq.s32.totalorder %s9, 1
    %p92 = por %p90, %p91
    %p93 = scmp.ne.s32.totalorder %s85, %s88
    %p94 = scmp.eq.s32.totalorder %s9, 0
    %p95 = por %p93, %p94
    %p96 = scmp.ne.s32.totalorder %s85, %s88
    %p97 = scmp.eq.s32.totalorder %s14, 1
    %p98 = por %p96, %p97
    %p99 = scmp.ne.s32.totalorder %s88, %s89
    %p100 = scmp.eq.s32.totalorder %s14, 0
    %p101 = por %p99, %p100
    %p102 = scmp.ne.s32.totalorder %s88, %s89
    %p103 = scmp.eq.s32.totalorder %s15, 1
    %p104 = por %p102, %p103
    %p106 = scmp.ne.s32.totalorder %s89, %s105
    %p107 = scmp.eq.s32.totalorder %s15, 0
    %p108 = por %p106, %p107
    %s109 = ssub.s32 %s16, %s28
    %s110 = ssub.s32 %s17, %s24
    %s111 = sor.u32 %s109, %s110
    %p112 = scmp.eq.s32.totalorder %s111, 0
    %s114 = sadd.s32 %s113, 1
    %s115 = scalar_select %p112, %s113, %s114
    %p118 = pneg %p112
    %p119 = scmp.eq.s32.totalorder %s9, 1
    %p120 = por %p118, %p119
    %p121 = scmp.ne.s32.totalorder %s113, %s116
    %p122 = scmp.eq.s32.totalorder %s9, 0
    %p123 = por %p121, %p122
    %p124 = scmp.ne.s32.totalorder %s113, %s116
    %p125 = scmp.eq.s32.totalorder %s14, 1
    %p126 = por %p124, %p125
    %p127 = scmp.ne.s32.totalorder %s116, %s117
    %p128 = scmp.eq.s32.totalorder %s14, 0
    %p129 = por %p127, %p128
    %p130 = scmp.ne.s32.totalorder %s116, %s117
    %p131 = scmp.eq.s32.totalorder %s15, 1
    %p132 = por %p130, %p131
    %p134 = scmp.ne.s32.totalorder %s117, %s133
    %p135 = scmp.eq.s32.totalorder %s15, 0
    %p136 = por %p134, %p135
    %p137 = scmp.le.s32.totalorder 1, %s9
    %p138 = scmp.lt.s32.totalorder %s9, 3
    %p139 = pnand %p137, %p138
    %p140 = pneg %p139
    // Predicated region
    $region9: #{forward.4} parent=5 // pred_check
      _
    $region10: #{forward.4} parent=5 // pred_check_branch
      %142 = sbr.rel (%p139) target = $region12
    $region11: #{forward.4} parent=5 // pred_region
      %s143 = ssub.s32 %s9, 1
      // Predicated region
      $region13: #{forward.4} parent=11 // pred_check
        %p144 = pneg %p75
      $region14: #{forward.4} parent=11 // pred_check_branch
        %146 = sbr.rel (%p144) target = $region16
      $region15: #{forward.4} parent=11 // pred_region
        %p147 = scmp.lt.s32.totalorder %s19, 0
        %s148 = scalar_select %p147, %s19, 0
        %s149 = scalar_lea.vmem %s1, %s148
      $region16: #{forward.4} parent=11 // pred_fallthru
        _
      // Predicated region
      $region17: #{forward.4} parent=11 // pred_check
        %p150 = pneg %p101
      $region18: #{forward.4} parent=11 // pred_check_branch
        %152 = sbr.rel (%p150) target = $region20
      $region19: #{forward.4} parent=11 // pred_region
        %p153 = scmp.lt.s32.totalorder %s19, 0
        %s154 = scalar_select %p153, %s19, 0
        %s155 = scalar_lea.vmem %s2, %s154
      $region20: #{forward.4} parent=11 // pred_fallthru
        _
    $region12: #{forward.4} parent=5 // pred_fallthru
      _
    %p156 = scmp.lt.s32.totalorder %s9, 2
    // Predicated region
    $region21: #{forward.4} parent=5 // pred_check
      %p157 = pneg %p156
    $region22: #{forward.4} parent=5 // pred_check_branch
      %159 = sbr.rel (%p157) target = $region24
    $region23: #{forward.4} parent=5 // pred_region
      // Predicated region
      $region25: #{forward.4} parent=23 // pred_check
        %p160 = pneg %p43
      $region26: #{forward.4} parent=23 // pred_check_branch
        %162 = sbr.rel (%p160) target = $region28
      $region27: #{forward.4} parent=23 // pred_region
        %p163 = scmp.lt.s32.totalorder %s16, 1
        %s164 = scalar_select %p163, %s16, 1
        %p165 = scmp.lt.s32.totalorder %s17, 0
        %s166 = scalar_select %p165, %s17, 0
        %s167 = smul.addr %s164, 13
        %s168 = sadd.s32 %s166, %s167
        %s169 = smul.addr %s168, 8
        %s170 = scalar_lea.vmem %s0, %s169
      $region28: #{forward.4} parent=23 // pred_fallthru
        _
    $region24: #{forward.4} parent=5 // pred_fallthru
      _
    %p171 = scmp.le.s32.totalorder 1, %s9
    %p172 = scmp.lt.s32.totalorder %s9, 3
    %p173 = pnand %p171, %p172
    %p174 = pneg %p173
    // Predicated region
    $region29: #{forward.4} parent=5 // pred_check
      _
    $region30: #{forward.4} parent=5 // pred_check_branch
      %176 = sbr.rel (%p173) target = $region32
    $region31: #{forward.4} parent=5 // pred_region
      %s177 = ssub.s32 %s9, 1
      %p178 = scmp.lt.s32.totalorder %s18, 1
      %s179 = scalar_select %p178, %s18, 1
      %p180 = scmp.lt.s32.totalorder %s19, 0
      %s181 = scalar_select %p180, %s19, 0
      %s182 = smul.addr %s179, 13
      %s183 = sadd.s32 %s181, %s182
      %s184 = smul.addr %s183, 8
      %s185 = scalar_lea.vmem %s0, %s184
      %p186 = pneg %p49
      %p187 = pneg %p46
      %p188 = scmp.lt.s32.totalorder %s19, 0
      %s189 = scalar_select %p188, %s19, 0
      %s190 = scalar_lea.vmem %s1, %s189
      %p191 = pneg %p75
      %p192 = pneg %p72
      %p193 = scmp.lt.s32.totalorder %s19, 0
      %s194 = scalar_select %p193, %s19, 0
      %s195 = scalar_lea.vmem %s2, %s194
      %p196 = pneg %p101
      %p197 = pneg %p98
      %p198 = pneg %p129
      %p199 = pneg %p126
      %p200 = scmp.lt.s32.totalorder %s18, 1
      %s201 = scalar_select %p200, %s18, 1
      %p202 = scmp.lt.s32.totalorder %s19, 0
      %s203 = scalar_select %p202, %s19, 0
      %s204 = smul.addr %s201, 13
      %s205 = sadd.s32 %s203, %s204
      %s206 = smul.addr %s205, 8
      %s207 = scalar_lea.vmem %s3, %s206
      %p208 = scmp.lt.s32.totalorder %s18, 1
      %s209 = scalar_select %p208, %s18, 1
      %p210 = scmp.lt.s32.totalorder %s19, 0
      %s211 = scalar_select %p210, %s19, 0
      %s212 = smul.addr %s209, 13
      %s213 = sadd.s32 %s211, %s212
      %s214 = smul.addr %s213, 8
      %s215 = scalar_lea.vmem %s0, %s214
      %p216 = scmp.lt.s32.totalorder %s19, 0
      %s217 = scalar_select %p216, %s19, 0
      %s218 = scalar_lea.vmem %s1, %s217
      %p219 = scmp.lt.s32.totalorder %s19, 0
      %s220 = scalar_select %p219, %s19, 0
      %s221 = scalar_lea.vmem %s2, %s220
      %p222 = scmp.lt.s32.totalorder %s18, 1
      %s223 = scalar_select %p222, %s18, 1
      %p224 = scmp.lt.s32.totalorder %s19, 0
      %s225 = scalar_select %p224, %s19, 0
      %s226 = smul.addr %s223, 13
      %s227 = sadd.s32 %s225, %s226
      %s228 = smul.addr %s227, 8
      %s229 = scalar_lea.vmem %s3, %s228
      %v230 = vld [vmem:[%s215] sm:$0xff]
      %v231 = vld [vmem:[%s215 + $0x8] sm:$0xff]
      %v232 = vld [vmem:[%s215 + $0x10] sm:$0xff]
      %v233 = vld [vmem:[%s215 + $0x18] sm:$0xff]
      %v234 = vld [vmem:[%s215 + $0x20] sm:$0xff]
      %v235 = vld [vmem:[%s215 + $0x28] sm:$0xff]
      %v236 = vld [vmem:[%s215 + $0x30] sm:$0xff]
      %v237 = vld [vmem:[%s215 + $0x38] sm:$0xff]
      %v238 = vld [vmem:[%s215 + $0x40] sm:$0xff]
      %v239 = vld [vmem:[%s215 + $0x48] sm:$0xff]
      %v240 = vld [vmem:[%s215 + $0x50] sm:$0xff]
      %v241 = vld [vmem:[%s215 + $0x58] sm:$0xff]
      %v242 = vld [vmem:[%s215 + $0x60] sm:$0xff]
      %v243 = vlaneseq
      %v244 = vshrl.u32 %v243, 7
      %v245 = vadd.s32 %v244, 8
      %v246 = vadd.s32 %v244, 16
      %v247 = vadd.s32 %v244, 24
      %v248 = vadd.s32 %v244, 32
      %v249 = vadd.s32 %v244, 40
      %v250 = vadd.s32 %v244, 48
      %v251 = vadd.s32 %v244, 56
      %v252 = vadd.s32 %v244, 64
      %v253 = vadd.s32 %v244, 72
      %v254 = vadd.s32 %v244, 80
      %v255 = vadd.s32 %v244, 88
      %v256 = vadd.s32 %v244, 96
      %vm257 = vcmp.lt.s32.totalorder %v244, 99
      %vm258 = vcmp.lt.s32.totalorder %v245, 99
      %vm259 = vcmp.lt.s32.totalorder %v246, 99
      %vm260 = vcmp.lt.s32.totalorder %v247, 99
      %vm261 = vcmp.lt.s32.totalorder %v248, 99
      %vm262 = vcmp.lt.s32.totalorder %v249, 99
      %vm263 = vcmp.lt.s32.totalorder %v250, 99
      %vm264 = vcmp.lt.s32.totalorder %v251, 99
      %vm265 = vcmp.lt.s32.totalorder %v252, 99
      %vm266 = vcmp.lt.s32.totalorder %v253, 99
      %vm267 = vcmp.lt.s32.totalorder %v254, 99
      %vm268 = vcmp.lt.s32.totalorder %v255, 99
      %vm269 = vcmp.lt.s32.totalorder %v256, 99
      %v270 = vsel %vm257, 1, 0
      %v271 = vsel %vm258, 1, 0
      %v272 = vsel %vm259, 1, 0
      %v273 = vsel %vm260, 1, 0
      %v274 = vsel %vm261, 1, 0
      %v275 = vsel %vm262, 1, 0
      %v276 = vsel %vm263, 1, 0
      %v277 = vsel %vm264, 1, 0
      %v278 = vsel %vm265, 1, 0
      %v279 = vsel %vm266, 1, 0
      %v280 = vsel %vm267, 1, 0
      %v281 = vsel %vm268, 1, 0
      %v282 = vsel %vm269, 1, 0
      %v283 = vcvt.s32.f32 %v270
      %v284 = vcvt.s32.f32 %v271
      %v285 = vcvt.s32.f32 %v272
      %v286 = vcvt.s32.f32 %v273
      %v287 = vcvt.s32.f32 %v274
      %v288 = vcvt.s32.f32 %v275
      %v289 = vcvt.s32.f32 %v276
      %v290 = vcvt.s32.f32 %v277
      %v291 = vcvt.s32.f32 %v278
      %v292 = vcvt.s32.f32 %v279
      %v293 = vcvt.s32.f32 %v280
      %v294 = vcvt.s32.f32 %v281
      %v295 = vcvt.s32.f32 %v282
      %v296 = vmul.f32 %v230, %v283
      %v297 = vmul.f32 %v231, %v284
      %v298 = vmul.f32 %v232, %v285
      %v299 = vmul.f32 %v233, %v286
      %v300 = vmul.f32 %v234, %v287
      %v301 = vmul.f32 %v235, %v288
      %v302 = vmul.f32 %v236, %v289
      %v303 = vmul.f32 %v237, %v290
      %v304 = vmul.f32 %v238, %v291
      %v305 = vmul.f32 %v239, %v292
      %v306 = vmul.f32 %v240, %v293
      %v307 = vmul.f32 %v241, %v294
      %v308 = vmul.f32 %v242, %v295
      %v309 = vadd.f32 %v296, %v297
      %v310 = vadd.f32 %v309, %v298
      %v311 = vadd.f32 %v310, %v299
      %v312 = vadd.f32 %v311, %v300
      %v313 = vadd.f32 %v312, %v301
      %v314 = vadd.f32 %v313, %v302
      %v315 = vadd.f32 %v314, %v303
      %v316 = vadd.f32 %v315, %v304
      %v317 = vadd.f32 %v316, %v305
      %v318 = vadd.f32 %v317, %v306
      %v319 = vadd.f32 %v318, %v307
      %v320 = vadd.f32 %v319, %v308
      %v321 = vrot.slane %v320, 4
      %v322 = vadd.f32 %v320, %v321
      %v323 = vrot.slane %v322, 2
      %v324 = vadd.f32 %v322, %v323
      %v325 = vrot.slane %v324, 1
      %v326 = vadd.f32 %v324, %v325
      %v327 = vmul.f32 %v326, 0.01010101
      %v328 = vsub.f32 %v230, %v327
      %v329 = vsub.f32 %v231, %v327
      %v330 = vsub.f32 %v232, %v327
      %v331 = vsub.f32 %v233, %v327
      %v332 = vsub.f32 %v234, %v327
      %v333 = vsub.f32 %v235, %v327
      %v334 = vsub.f32 %v236, %v327
      %v335 = vsub.f32 %v237, %v327
      %v336 = vsub.f32 %v238, %v327
      %v337 = vsub.f32 %v239, %v327
      %v338 = vsub.f32 %v240, %v327
      %v339 = vsub.f32 %v241, %v327
      %v340 = vsub.f32 %v242, %v327
      %v341 = vmul.f32 %v328, %v328
      %v342 = vmul.f32 %v329, %v329
      %v343 = vmul.f32 %v330, %v330
      %v344 = vmul.f32 %v331, %v331
      %v345 = vmul.f32 %v332, %v332
      %v346 = vmul.f32 %v333, %v333
      %v347 = vmul.f32 %v334, %v334
      %v348 = vmul.f32 %v335, %v335
      %v349 = vmul.f32 %v336, %v336
      %v350 = vmul.f32 %v337, %v337
      %v351 = vmul.f32 %v338, %v338
      %v352 = vmul.f32 %v339, %v339
      %v353 = vmul.f32 %v340, %v340
      %v354 = vmul.f32 %v341, %v283
      %v355 = vmul.f32 %v342, %v284
      %v356 = vmul.f32 %v343, %v285
      %v357 = vmul.f32 %v344, %v286
      %v358 = vmul.f32 %v345, %v287
      %v359 = vmul.f32 %v346, %v288
      %v360 = vmul.f32 %v347, %v289
      %v361 = vmul.f32 %v348, %v290
      %v362 = vmul.f32 %v349, %v291
      %v363 = vmul.f32 %v350, %v292
      %v364 = vmul.f32 %v351, %v293
      %v365 = vmul.f32 %v352, %v294
      %v366 = vmul.f32 %v353, %v295
      %v367 = vadd.f32 %v354, %v355
      %v368 = vadd.f32 %v367, %v356
      %v369 = vadd.f32 %v368, %v357
      %v370 = vadd.f32 %v369, %v358
      %v371 = vadd.f32 %v370, %v359
      %v372 = vadd.f32 %v371, %v360
      %v373 = vadd.f32 %v372, %v361
      %v374 = vadd.f32 %v373, %v362
      %v375 = vadd.f32 %v374, %v363
      %v376 = vadd.f32 %v375, %v364
      %v377 = vadd.f32 %v376, %v365
      %v378 = vadd.f32 %v377, %v366
      %v379 = vrot.slane %v378, 4
      %v380 = vadd.f32 %v378, %v379
      %v381 = vrot.slane %v380, 2
      %v382 = vadd.f32 %v380, %v381
      %v383 = vrot.slane %v382, 1
      %v384 = vadd.f32 %v382, %v383
      %v385 = vmul.f32 %v384, 0.01010101
      %v386 = vadd.f32 %v385, 1e-05
      %v387 = vrsqrt.pop %v386
      %v388 = vmul.f32 %v328, %v387
      %v389 = vmul.f32 %v329, %v387
      %v390 = vmul.f32 %v330, %v387
      %v391 = vmul.f32 %v331, %v387
      %v392 = vmul.f32 %v332, %v387
      %v393 = vmul.f32 %v333, %v387
      %v394 = vmul.f32 %v334, %v387
      %v395 = vmul.f32 %v335, %v387
      %v396 = vmul.f32 %v336, %v387
      %v397 = vmul.f32 %v337, %v387
      %v398 = vmul.f32 %v338, %v387
      %v399 = vmul.f32 %v339, %v387
      %v400 = vmul.f32 %v340, %v387
      %v401 = vld [vmem:[%s218] sm:$0x1]
      %v403 = vlaneseq
      %v404 = vshrl.u32 %v403, 7
      %v405 = vsub.s32 0, %v404
      %v406 = vrot.slane %v401, %v405
      %v408 = vmul.f32 %v388, %v406
      %v409 = vmul.f32 %v389, %v406
      %v410 = vmul.f32 %v390, %v406
      %v411 = vmul.f32 %v391, %v406
      %v412 = vmul.f32 %v392, %v406
      %v413 = vmul.f32 %v393, %v406
      %v414 = vmul.f32 %v394, %v406
      %v415 = vmul.f32 %v395, %v406
      %v416 = vmul.f32 %v396, %v406
      %v417 = vmul.f32 %v397, %v406
      %v418 = vmul.f32 %v398, %v406
      %v419 = vmul.f32 %v399, %v406
      %v420 = vmul.f32 %v400, %v406
      %v421 = vld [vmem:[%s221] sm:$0x1]
      %v423 = vlaneseq
      %v424 = vshrl.u32 %v423, 7
      %v425 = vsub.s32 0, %v424
      %v426 = vrot.slane %v421, %v425
      %v428 = vadd.f32 %v408, %v426
      %v429 = vadd.f32 %v409, %v426
      %v430 = vadd.f32 %v410, %v426
      %v431 = vadd.f32 %v411, %v426
      %v432 = vadd.f32 %v412, %v426
      %v433 = vadd.f32 %v413, %v426
      %v434 = vadd.f32 %v414, %v426
      %v435 = vadd.f32 %v415, %v426
      %v436 = vadd.f32 %v416, %v426
      %v437 = vadd.f32 %v417, %v426
      %v438 = vadd.f32 %v418, %v426
      %v439 = vadd.f32 %v419, %v426
      %v440 = vadd.f32 %v420, %v426
      %v441 = vmul.f32 %v428, 0.5
      %v442 = vmul.f32 %v429, 0.5
      %v443 = vmul.f32 %v430, 0.5
      %v444 = vmul.f32 %v431, 0.5
      %v445 = vmul.f32 %v432, 0.5
      %v446 = vmul.f32 %v433, 0.5
      %v447 = vmul.f32 %v434, 0.5
      %v448 = vmul.f32 %v435, 0.5
      %v449 = vmul.f32 %v436, 0.5
      %v450 = vmul.f32 %v437, 0.5
      %v451 = vmul.f32 %v438, 0.5
      %v452 = vmul.f32 %v439, 0.5
      %v453 = vmul.f32 %v440, 0.5
      %v454 = vmul.f32 %v428, 0.70710677
      %v455 = vmul.f32 %v429, 0.70710677
      %v456 = vmul.f32 %v430, 0.70710677
      %v457 = vmul.f32 %v431, 0.70710677
      %v458 = vmul.f32 %v432, 0.70710677
      %v459 = vmul.f32 %v433, 0.70710677
      %v460 = vmul.f32 %v434, 0.70710677
      %v461 = vmul.f32 %v435, 0.70710677
      %v462 = vmul.f32 %v436, 0.70710677
      %v463 = vmul.f32 %v437, 0.70710677
      %v464 = vmul.f32 %v438, 0.70710677
      %v465 = vmul.f32 %v439, 0.70710677
      %v466 = vmul.f32 %v440, 0.70710677
      %v467 = vand.u32 2147483647, %v454
      %v468 = vand.u32 2147483647, %v455
      %v469 = vand.u32 2147483647, %v456
      %v470 = vand.u32 2147483647, %v457
      %v471 = vand.u32 2147483647, %v458
      %v472 = vand.u32 2147483647, %v459
      %v473 = vand.u32 2147483647, %v460
      %v474 = vand.u32 2147483647, %v461
      %v475 = vand.u32 2147483647, %v462
      %v476 = vand.u32 2147483647, %v463
      %v477 = vand.u32 2147483647, %v464
      %v478 = vand.u32 2147483647, %v465
      %v479 = vand.u32 2147483647, %v466
      %v480 = vmul.f32 %v467, 0.3275911
      %v481 = vmul.f32 %v468, 0.3275911
      %v482 = vmul.f32 %v469, 0.3275911
      %v483 = vmul.f32 %v470, 0.3275911
      %v484 = vmul.f32 %v471, 0.3275911
      %v485 = vmul.f32 %v472, 0.3275911
      %v486 = vmul.f32 %v473, 0.3275911
      %v487 = vmul.f32 %v474, 0.3275911
      %v488 = vmul.f32 %v475, 0.3275911
      %v489 = vmul.f32 %v476, 0.3275911
      %v490 = vmul.f32 %v477, 0.3275911
      %v491 = vmul.f32 %v478, 0.3275911
      %v492 = vmul.f32 %v479, 0.3275911
      %v493 = vadd.f32 %v480, 1.0
      %v494 = vadd.f32 %v481, 1.0
      %v495 = vadd.f32 %v482, 1.0
      %v496 = vadd.f32 %v483, 1.0
      %v497 = vadd.f32 %v484, 1.0
      %v498 = vadd.f32 %v485, 1.0
      %v499 = vadd.f32 %v486, 1.0
      %v500 = vadd.f32 %v487, 1.0
      %v501 = vadd.f32 %v488, 1.0
      %v502 = vadd.f32 %v489, 1.0
      %v503 = vadd.f32 %v490, 1.0
      %v504 = vadd.f32 %v491, 1.0
      %v505 = vadd.f32 %v492, 1.0
      %v506 = vrcp.pop %v493
      %v507 = vrcp.pop %v494
      %v508 = vrcp.pop %v495
      %v509 = vrcp.pop %v496
      %v510 = vrcp.pop %v497
      %v511 = vrcp.pop %v498
      %v512 = vrcp.pop %v499
      %v513 = vrcp.pop %v500
      %v514 = vrcp.pop %v501
      %v515 = vrcp.pop %v502
      %v516 = vrcp.pop %v503
      %v517 = vrcp.pop %v504
      %v518 = vrcp.pop %v505
      %v519 = vmul.f32 %v506, 1.0614054
      %v520 = vmul.f32 %v507, 1.0614054
      %v521 = vmul.f32 %v508, 1.0614054
      %v522 = vmul.f32 %v509, 1.0614054
      %v523 = vmul.f32 %v510, 1.0614054
      %v524 = vmul.f32 %v511, 1.0614054
      %v525 = vmul.f32 %v512, 1.0614054
      %v526 = vmul.f32 %v513, 1.0614054
      %v527 = vmul.f32 %v514, 1.0614054
      %v528 = vmul.f32 %v515, 1.0614054
      %v529 = vmul.f32 %v516, 1.0614054
      %v530 = vmul.f32 %v517, 1.0614054
      %v531 = vmul.f32 %v518, 1.0614054
      %v532 = vadd.f32 %v519, -1.4531521
      %v533 = vadd.f32 %v520, -1.4531521
      %v534 = vadd.f32 %v521, -1.4531521
      %v535 = vadd.f32 %v522, -1.4531521
      %v536 = vadd.f32 %v523, -1.4531521
      %v537 = vadd.f32 %v524, -1.4531521
      %v538 = vadd.f32 %v525, -1.4531521
      %v539 = vadd.f32 %v526, -1.4531521
      %v540 = vadd.f32 %v527, -1.4531521
      %v541 = vadd.f32 %v528, -1.4531521
      %v542 = vadd.f32 %v529, -1.4531521
      %v543 = vadd.f32 %v530, -1.4531521
      %v544 = vadd.f32 %v531, -1.4531521
      %v545 = vmul.f32 %v532, %v506
      %v546 = vmul.f32 %v533, %v507
      %v547 = vmul.f32 %v534, %v508
      %v548 = vmul.f32 %v535, %v509
      %v549 = vmul.f32 %v536, %v510
      %v550 = vmul.f32 %v537, %v511
      %v551 = vmul.f32 %v538, %v512
      %v552 = vmul.f32 %v539, %v513
      %v553 = vmul.f32 %v540, %v514
      %v554 = vmul.f32 %v541, %v515
      %v555 = vmul.f32 %v542, %v516
      %v556 = vmul.f32 %v543, %v517
      %v557 = vmul.f32 %v544, %v518
      %v558 = vadd.f32 %v545, 1.4214138
      %v559 = vadd.f32 %v546, 1.4214138
      %v560 = vadd.f32 %v547, 1.4214138
      %v561 = vadd.f32 %v548, 1.4214138
      %v562 = vadd.f32 %v549, 1.4214138
      %v563 = vadd.f32 %v550, 1.4214138
      %v564 = vadd.f32 %v551, 1.4214138
      %v565 = vadd.f32 %v552, 1.4214138
      %v566 = vadd.f32 %v553, 1.4214138
      %v567 = vadd.f32 %v554, 1.4214138
      %v568 = vadd.f32 %v555, 1.4214138
      %v569 = vadd.f32 %v556, 1.4214138
      %v570 = vadd.f32 %v557, 1.4214138
      %v571 = vmul.f32 %v558, %v506
      %v572 = vmul.f32 %v559, %v507
      %v573 = vmul.f32 %v560, %v508
      %v574 = vmul.f32 %v561, %v509
      %v575 = vmul.f32 %v562, %v510
      %v576 = vmul.f32 %v563, %v511
      %v577 = vmul.f32 %v564, %v512
      %v578 = vmul.f32 %v565, %v513
      %v579 = vmul.f32 %v566, %v514
      %v580 = vmul.f32 %v567, %v515
      %v581 = vmul.f32 %v568, %v516
      %v582 = vmul.f32 %v569, %v517
      %v583 = vmul.f32 %v570, %v518
      %v584 = vadd.f32 %v571, -0.28449672
      %v585 = vadd.f32 %v572, -0.28449672
      %v586 = vadd.f32 %v573, -0.28449672
      %v587 = vadd.f32 %v574, -0.28449672
      %v588 = vadd.f32 %v575, -0.28449672
      %v589 = vadd.f32 %v576, -0.28449672
      %v590 = vadd.f32 %v577, -0.28449672
      %v591 = vadd.f32 %v578, -0.28449672
      %v592 = vadd.f32 %v579, -0.28449672
      %v593 = vadd.f32 %v580, -0.28449672
      %v594 = vadd.f32 %v581, -0.28449672
      %v595 = vadd.f32 %v582, -0.28449672
      %v596 = vadd.f32 %v583, -0.28449672
      %v597 = vmul.f32 %v584, %v506
      %v598 = vmul.f32 %v585, %v507
      %v599 = vmul.f32 %v586, %v508
      %v600 = vmul.f32 %v587, %v509
      %v601 = vmul.f32 %v588, %v510
      %v602 = vmul.f32 %v589, %v511
      %v603 = vmul.f32 %v590, %v512
      %v604 = vmul.f32 %v591, %v513
      %v605 = vmul.f32 %v592, %v514
      %v606 = vmul.f32 %v593, %v515
      %v607 = vmul.f32 %v594, %v516
      %v608 = vmul.f32 %v595, %v517
      %v609 = vmul.f32 %v596, %v518
      %v610 = vadd.f32 %v597, 0.2548296
      %v611 = vadd.f32 %v598, 0.2548296
      %v612 = vadd.f32 %v599, 0.2548296
      %v613 = vadd.f32 %v600, 0.2548296
      %v614 = vadd.f32 %v601, 0.2548296
      %v615 = vadd.f32 %v602, 0.2548296
      %v616 = vadd.f32 %v603, 0.2548296
      %v617 = vadd.f32 %v604, 0.2548296
      %v618 = vadd.f32 %v605, 0.2548296
      %v619 = vadd.f32 %v606, 0.2548296
      %v620 = vadd.f32 %v607, 0.2548296
      %v621 = vadd.f32 %v608, 0.2548296
      %v622 = vadd.f32 %v609, 0.2548296
      %v623 = vmul.f32 %v610, %v506
      %v624 = vmul.f32 %v611, %v507
      %v625 = vmul.f32 %v612, %v508
      %v626 = vmul.f32 %v613, %v509
      %v627 = vmul.f32 %v614, %v510
      %v628 = vmul.f32 %v615, %v511
      %v629 = vmul.f32 %v616, %v512
      %v630 = vmul.f32 %v617, %v513
      %v631 = vmul.f32 %v618, %v514
      %v632 = vmul.f32 %v619, %v515
      %v633 = vmul.f32 %v620, %v516
      %v634 = vmul.f32 %v621, %v517
      %v635 = vmul.f32 %v622, %v518
      %v636 = vsub.f32 0.0, %v467
      %v637 = vsub.f32 0.0, %v468
      %v638 = vsub.f32 0.0, %v469
      %v639 = vsub.f32 0.0, %v470
      %v640 = vsub.f32 0.0, %v471
      %v641 = vsub.f32 0.0, %v472
      %v642 = vsub.f32 0.0, %v473
      %v643 = vsub.f32 0.0, %v474
      %v644 = vsub.f32 0.0, %v475
      %v645 = vsub.f32 0.0, %v476
      %v646 = vsub.f32 0.0, %v477
      %v647 = vsub.f32 0.0, %v478
      %v648 = vsub.f32 0.0, %v479
      %v649 = vmul.f32 %v636, %v467
      %v650 = vmul.f32 %v637, %v468
      %v651 = vmul.f32 %v638, %v469
      %v652 = vmul.f32 %v639, %v470
      %v653 = vmul.f32 %v640, %v471
      %v654 = vmul.f32 %v641, %v472
      %v655 = vmul.f32 %v642, %v473
      %v656 = vmul.f32 %v643, %v474
      %v657 = vmul.f32 %v644, %v475
      %v658 = vmul.f32 %v645, %v476
      %v659 = vmul.f32 %v646, %v477
      %v660 = vmul.f32 %v647, %v478
      %v661 = vmul.f32 %v648, %v479
      %v662 = vmul.f32 %v649, 1.442695
      %v663 = vpow.pop %v662
      %v664 = vmul.f32 %v650, 1.442695
      %v665 = vpow.pop %v664
      %v666 = vmul.f32 %v651, 1.442695
      %v667 = vpow.pop %v666
      %v668 = vmul.f32 %v652, 1.442695
      %v669 = vpow.pop %v668
      %v670 = vmul.f32 %v653, 1.442695
      %v671 = vpow.pop %v670
      %v672 = vmul.f32 %v654, 1.442695
      %v673 = vpow.pop %v672
      %v674 = vmul.f32 %v655, 1.442695
      %v675 = vpow.pop %v674
      %v676 = vmul.f32 %v656, 1.442695
      %v677 = vpow.pop %v676
      %v678 = vmul.f32 %v657, 1.442695
      %v679 = vpow.pop %v678
      %v680 = vmul.f32 %v658, 1.442695
      %v681 = vpow.pop %v680
      %v682 = vmul.f32 %v659, 1.442695
      %v683 = vpow.pop %v682
      %v684 = vmul.f32 %v660, 1.442695
      %v685 = vpow.pop %v684
      %v686 = vmul.f32 %v661, 1.442695
      %v687 = vpow.pop %v686
      %v688 = vmul.f32 %v623, %v663
      %v689 = vmul.f32 %v624, %v665
      %v690 = vmul.f32 %v625, %v667
      %v691 = vmul.f32 %v626, %v669
      %v692 = vmul.f32 %v627, %v671
      %v693 = vmul.f32 %v628, %v673
      %v694 = vmul.f32 %v629, %v675
      %v695 = vmul.f32 %v630, %v677
      %v696 = vmul.f32 %v631, %v679
      %v697 = vmul.f32 %v632, %v681
      %v698 = vmul.f32 %v633, %v683
      %v699 = vmul.f32 %v634, %v685
      %v700 = vmul.f32 %v635, %v687
      %v701 = vsub.f32 1.0, %v688
      %v702 = vsub.f32 1.0, %v689
      %v703 = vsub.f32 1.0, %v690
      %v704 = vsub.f32 1.0, %v691
      %v705 = vsub.f32 1.0, %v692
      %v706 = vsub.f32 1.0, %v693
      %v707 = vsub.f32 1.0, %v694
      %v708 = vsub.f32 1.0, %v695
      %v709 = vsub.f32 1.0, %v696
      %v710 = vsub.f32 1.0, %v697
      %v711 = vsub.f32 1.0, %v698
      %v712 = vsub.f32 1.0, %v699
      %v713 = vsub.f32 1.0, %v700
      %vm714 = vcmp.ge.f32.partialorder %v454, 0.0
      %vm715 = vcmp.ge.f32.partialorder %v455, 0.0
      %vm716 = vcmp.ge.f32.partialorder %v456, 0.0
      %vm717 = vcmp.ge.f32.partialorder %v457, 0.0
      %vm718 = vcmp.ge.f32.partialorder %v458, 0.0
      %vm719 = vcmp.ge.f32.partialorder %v459, 0.0
      %vm720 = vcmp.ge.f32.partialorder %v460, 0.0
      %vm721 = vcmp.ge.f32.partialorder %v461, 0.0
      %vm722 = vcmp.ge.f32.partialorder %v462, 0.0
      %vm723 = vcmp.ge.f32.partialorder %v463, 0.0
      %vm724 = vcmp.ge.f32.partialorder %v464, 0.0
      %vm725 = vcmp.ge.f32.partialorder %v465, 0.0
      %vm726 = vcmp.ge.f32.partialorder %v466, 0.0
      %v727 = vsub.f32 0.0, %v701
      %v728 = vsub.f32 0.0, %v702
      %v729 = vsub.f32 0.0, %v703
      %v730 = vsub.f32 0.0, %v704
      %v731 = vsub.f32 0.0, %v705
      %v732 = vsub.f32 0.0, %v706
      %v733 = vsub.f32 0.0, %v707
      %v734 = vsub.f32 0.0, %v708
      %v735 = vsub.f32 0.0, %v709
      %v736 = vsub.f32 0.0, %v710
      %v737 = vsub.f32 0.0, %v711
      %v738 = vsub.f32 0.0, %v712
      %v739 = vsub.f32 0.0, %v713
      %v740 = vsel %vm714, %v701, %v727
      %v741 = vsel %vm715, %v702, %v728
      %v742 = vsel %vm716, %v703, %v729
      %v743 = vsel %vm717, %v704, %v730
      %v744 = vsel %vm718, %v705, %v731
      %v745 = vsel %vm719, %v706, %v732
      %v746 = vsel %vm720, %v707, %v733
      %v747 = vsel %vm721, %v708, %v734
      %v748 = vsel %vm722, %v709, %v735
      %v749 = vsel %vm723, %v710, %v736
      %v750 = vsel %vm724, %v711, %v737
      %v751 = vsel %vm725, %v712, %v738
      %v752 = vsel %vm726, %v713, %v739
      %v753 = vadd.f32 %v740, 1.0
      %v754 = vadd.f32 %v741, 1.0
      %v755 = vadd.f32 %v742, 1.0
      %v756 = vadd.f32 %v743, 1.0
      %v757 = vadd.f32 %v744, 1.0
      %v758 = vadd.f32 %v745, 1.0
      %v759 = vadd.f32 %v746, 1.0
      %v760 = vadd.f32 %v747, 1.0
      %v761 = vadd.f32 %v748, 1.0
      %v762 = vadd.f32 %v749, 1.0
      %v763 = vadd.f32 %v750, 1.0
      %v764 = vadd.f32 %v751, 1.0
      %v765 = vadd.f32 %v752, 1.0
      %v766 = vmul.f32 %v441, %v753
      %v767 = vmul.f32 %v442, %v754
      %v768 = vmul.f32 %v443, %v755
      %v769 = vmul.f32 %v444, %v756
      %v770 = vmul.f32 %v445, %v757
      %v771 = vmul.f32 %v446, %v758
      %v772 = vmul.f32 %v447, %v759
      %v773 = vmul.f32 %v448, %v760
      %v774 = vmul.f32 %v449, %v761
      %v775 = vmul.f32 %v450, %v762
      %v776 = vmul.f32 %v451, %v763
      %v777 = vmul.f32 %v452, %v764
      %v778 = vmul.f32 %v453, %v765
      %779 = vst [vmem:[%s229] sm:$0xff] %v766
      %780 = vst [vmem:[%s229 + $0x8] sm:$0xff] %v767
      %781 = vst [vmem:[%s229 + $0x10] sm:$0xff] %v768
      %782 = vst [vmem:[%s229 + $0x18] sm:$0xff] %v769
      %783 = vst [vmem:[%s229 + $0x20] sm:$0xff] %v770
      %784 = vst [vmem:[%s229 + $0x28] sm:$0xff] %v771
      %785 = vst [vmem:[%s229 + $0x30] sm:$0xff] %v772
      %786 = vst [vmem:[%s229 + $0x38] sm:$0xff] %v773
      %787 = vst [vmem:[%s229 + $0x40] sm:$0xff] %v774
      %788 = vst [vmem:[%s229 + $0x48] sm:$0xff] %v775
      %789 = vst [vmem:[%s229 + $0x50] sm:$0xff] %v776
      %790 = vst [vmem:[%s229 + $0x58] sm:$0xff] %v777
      %791 = vst [vmem:[%s229 + $0x60] sm:$0xff] %v778
      %p792 = scmp.lt.s32.totalorder %s18, 1
      %s793 = scalar_select %p792, %s18, 1
      %p794 = scmp.lt.s32.totalorder %s19, 0
      %s795 = scalar_select %p794, %s19, 0
      %s796 = smul.addr %s793, 13
      %s797 = sadd.s32 %s795, %s796
      %s798 = smul.addr %s797, 8
      %s799 = scalar_lea.vmem %s3, %s798
      // Predicated region
      $region33: #{forward.4} parent=31 // pred_check
        %p800 = pneg %p126
      $region34: #{forward.4} parent=31 // pred_check_branch
        %802 = sbr.rel (%p800) target = $region36
      $region35: #{forward.4} parent=31 // pred_region
        _
      $region36: #{forward.4} parent=31 // pred_fallthru
        _
    $region32: #{forward.4} parent=5 // pred_fallthru
      _
    %p803 = scmp.le.s32.totalorder 2, %s9
    // Predicated region
    $region37: #{forward.4} parent=5 // pred_check
      %p804 = pneg %p803
    $region38: #{forward.4} parent=5 // pred_check_branch
      %806 = sbr.rel (%p804) target = $region40
    $region39: #{forward.4} parent=5 // pred_region
      %s807 = ssub.s32 %s9, 2
      // Predicated region
      $region41: #{forward.4} parent=39 // pred_check
        %p808 = pneg %p132
      $region42: #{forward.4} parent=39 // pred_check_branch
        %810 = sbr.rel (%p808) target = $region44
      $region43: #{forward.4} parent=39 // pred_region
        %p811 = scmp.lt.s32.totalorder %s20, 1
        %s812 = scalar_select %p811, %s20, 1
        %p813 = scmp.lt.s32.totalorder %s21, 0
        %s814 = scalar_select %p813, %s21, 0
        %s815 = smul.addr %s812, 13
        %s816 = sadd.s32 %s814, %s815
        %s817 = smul.addr %s816, 8
        %s818 = scalar_lea.vmem %s3, %s817
      $region44: #{forward.4} parent=39 // pred_fallthru
        _
    $region40: #{forward.4} parent=5 // pred_fallthru
      _
  $region6: #{forward.4} parent=0 // loop_footer
    %s13 = sadd.s32 1, %s9
  $region7: #{forward.4} parent=0 // loop_footer_branch
    %8 = sbr.rel target = $region3
  $region8: #{forward.4} parent=0 // loop_exit
    _

// kernel: forward.5
$region0: #{forward.5}
  #allocation0 [shape = 'u32[]', space=smem, size = 0x4, offset = 0x4, fixed_abs, tag = 'smem constant byte address 0x4 - core index']
  #allocation1 [shape = 'u32[144,128]{1,0:T(1,128)}', space=vmem, size = 0x12000, scoped, tag = 'internal scratch']
  %s0 = inlined_call_operand.vmem [shape: bf16[2,2,58,128], index: 0, kind: input, shape index: {}]
  %s1 = inlined_call_operand.vmem [shape: bf16[384,128], index: 1, kind: input, shape index: {}]
  %s2 = inlined_call_operand.vmem [shape: f32[1,128], index: 2, kind: input, shape index: {}]
  %s3 = inlined_call_operand.vmem [shape: f32[2,56,128], index: 3, kind: output, shape index: {}]
  %s4 = sld [smem:[#allocation0]]
  $region45: #{forward.5} parent=0
    _
  %s6 = ssub.s32 1, %s4
  %s7 = scalar_select 0, %s6, %s4
  loop: start=0, step=1, limit=4
  $region2: #{forward.5} parent=0 // loop_pre_header
    _
  $region3: #{forward.5} parent=0 // loop_header
    %s9 = sphi 0, %s13
    %p10 = scmp.ge.s32.totalorder %s9, 4
    %s16 = sphi 0, %s28
    %s17 = sphi 0, %s24
    %s18 = sphi 0, %s16
    %s19 = sphi 0, %s17
    %s20 = sphi 0, %s18
    %s21 = sphi 0, %s19
    %s31 = sphi 0, %s33
    %s34 = sphi 0, %s31
    %s35 = sphi 0, %s34
    %s51 = sphi 0, %s35
    %s55 = sphi 0, %s55
    %s57 = sphi 0, %s55
    %s58 = sphi 0, %s57
    %s72 = sphi 0, %s58
    %s76 = sphi 0, %s76
    %s78 = sphi 0, %s76
    %s79 = sphi 0, %s78
    %s93 = sphi 0, %s79
    %s101 = sphi 0, %s103
    %s104 = sphi 0, %s101
    %s105 = sphi 0, %s104
    %s121 = sphi 0, %s105
  $region4: #{forward.5} parent=0 // loop_header_branch
    %12 = sbr.rel (%p10) target = $region8
  $region5: #{forward.5} parent=0 // loop_body
    %s14 = ssub.s32 %s9, 1
    %s15 = ssub.s32 %s9, 2
    %s22 = sadd.s32 1, %s17
    %p23 = scmp.ge.s32.totalorder %s22, 1
    %s24 = scalar_select %p23, 0, %s22
    %s25 = sadd.s32 1, %s16
    %s26 = scalar_select %p23, %s25, %s16
    %p27 = scmp.ge.s32.totalorder %s26, 2
    %s28 = scalar_select %p27, 0, %s26
    %s29 = ssub.s32 %s16, %s28
    %p30 = scmp.eq.s32.totalorder %s29, 0
    %s32 = sadd.s32 %s31, 1
    %s33 = scalar_select %p30, %s31, %s32
    %p36 = pneg %p30
    %p37 = scmp.eq.s32.totalorder %s9, 1
    %p38 = por %p36, %p37
    %p39 = scmp.ne.s32.totalorder %s31, %s34
    %p40 = scmp.eq.s32.totalorder %s9, 0
    %p41 = por %p39, %p40
    %p42 = scmp.ne.s32.totalorder %s31, %s34
    %p43 = scmp.eq.s32.totalorder %s14, 1
    %p44 = por %p42, %p43
    %p45 = scmp.ne.s32.totalorder %s34, %s35
    %p46 = scmp.eq.s32.totalorder %s14, 0
    %p47 = por %p45, %p46
    %p48 = scmp.ne.s32.totalorder %s34, %s35
    %p49 = scmp.eq.s32.totalorder %s15, 1
    %p50 = por %p48, %p49
    %p52 = scmp.ne.s32.totalorder %s35, %s51
    %p53 = scmp.eq.s32.totalorder %s15, 0
    %p54 = por %p52, %p53
    %s56 = sadd.s32 %s55, 1
    %p59 = scmp.eq.s32.totalorder %s9, 1
    %p60 = scmp.ne.s32.totalorder %s55, %s57
    %p61 = scmp.eq.s32.totalorder %s9, 0
    %p62 = por %p60, %p61
    %p63 = scmp.ne.s32.totalorder %s55, %s57
    %p64 = scmp.eq.s32.totalorder %s14, 1
    %p65 = por %p63, %p64
    %p66 = scmp.ne.s32.totalorder %s57, %s58
    %p67 = scmp.eq.s32.totalorder %s14, 0
    %p68 = por %p66, %p67
    %p69 = scmp.ne.s32.totalorder %s57, %s58
    %p70 = scmp.eq.s32.totalorder %s15, 1
    %p71 = por %p69, %p70
    %p73 = scmp.ne.s32.totalorder %s58, %s72
    %p74 = scmp.eq.s32.totalorder %s15, 0
    %p75 = por %p73, %p74
    %s77 = sadd.s32 %s76, 1
    %p80 = scmp.eq.s32.totalorder %s9, 1
    %p81 = scmp.ne.s32.totalorder %s76, %s78
    %p82 = scmp.eq.s32.totalorder %s9, 0
    %p83 = por %p81, %p82
    %p84 = scmp.ne.s32.totalorder %s76, %s78
    %p85 = scmp.eq.s32.totalorder %s14, 1
    %p86 = por %p84, %p85
    %p87 = scmp.ne.s32.totalorder %s78, %s79
    %p88 = scmp.eq.s32.totalorder %s14, 0
    %p89 = por %p87, %p88
    %p90 = scmp.ne.s32.totalorder %s78, %s79
    %p91 = scmp.eq.s32.totalorder %s15, 1
    %p92 = por %p90, %p91
    %p94 = scmp.ne.s32.totalorder %s79, %s93
    %p95 = scmp.eq.s32.totalorder %s15, 0
    %p96 = por %p94, %p95
    %s97 = ssub.s32 %s16, %s28
    %s98 = ssub.s32 %s17, %s24
    %s99 = sor.u32 %s97, %s98
    %p100 = scmp.eq.s32.totalorder %s99, 0
    %s102 = sadd.s32 %s101, 1
    %s103 = scalar_select %p100, %s101, %s102
    %p106 = pneg %p100
    %p107 = scmp.eq.s32.totalorder %s9, 1
    %p108 = por %p106, %p107
    %p109 = scmp.ne.s32.totalorder %s101, %s104
    %p110 = scmp.eq.s32.totalorder %s9, 0
    %p111 = por %p109, %p110
    %p112 = scmp.ne.s32.totalorder %s101, %s104
    %p113 = scmp.eq.s32.totalorder %s14, 1
    %p114 = por %p112, %p113
    %p115 = scmp.ne.s32.totalorder %s104, %s105
    %p116 = scmp.eq.s32.totalorder %s14, 0
    %p117 = por %p115, %p116
    %p118 = scmp.ne.s32.totalorder %s104, %s105
    %p119 = scmp.eq.s32.totalorder %s15, 1
    %p120 = por %p118, %p119
    %p122 = scmp.ne.s32.totalorder %s105, %s121
    %p123 = scmp.eq.s32.totalorder %s15, 0
    %p124 = por %p122, %p123
    %p125 = scmp.le.s32.totalorder 1, %s9
    %p126 = scmp.lt.s32.totalorder %s9, 3
    %p127 = pnand %p125, %p126
    %p128 = pneg %p127
    // Predicated region
    $region9: #{forward.5} parent=5 // pred_check
      _
    $region10: #{forward.5} parent=5 // pred_check_branch
      %130 = sbr.rel (%p127) target = $region12
    $region11: #{forward.5} parent=5 // pred_region
      %s131 = ssub.s32 %s9, 1
      // Predicated region
      $region13: #{forward.5} parent=11 // pred_check
        %p132 = pneg %p68
      $region14: #{forward.5} parent=11 // pred_check_branch
        %134 = sbr.rel (%p132) target = $region16
      $region15: #{forward.5} parent=11 // pred_region
        _
      $region16: #{forward.5} parent=11 // pred_fallthru
        _
      // Predicated region
      $region17: #{forward.5} parent=11 // pred_check
        %p135 = pneg %p89
      $region18: #{forward.5} parent=11 // pred_check_branch
        %137 = sbr.rel (%p135) target = $region20
      $region19: #{forward.5} parent=11 // pred_region
        _
      $region20: #{forward.5} parent=11 // pred_fallthru
        _
    $region12: #{forward.5} parent=5 // pred_fallthru
      _
    %p138 = scmp.lt.s32.totalorder %s9, 2
    // Predicated region
    $region21: #{forward.5} parent=5 // pred_check
      %p139 = pneg %p138
    $region22: #{forward.5} parent=5 // pred_check_branch
      %141 = sbr.rel (%p139) target = $region24
    $region23: #{forward.5} parent=5 // pred_region
      // Predicated region
      $region25: #{forward.5} parent=23 // pred_check
        %p142 = pneg %p41
      $region26: #{forward.5} parent=23 // pred_check_branch
        %144 = sbr.rel (%p142) target = $region28
      $region27: #{forward.5} parent=23 // pred_region
        %p145 = scmp.lt.s32.totalorder %s16, 1
        %s146 = scalar_select %p145, %s16, 1
        %s147 = smul.addr %s146, 16
        %s148 = smul.addr %s147, 4
        %s149 = scalar_lea.vmem %s0, %s148
      $region28: #{forward.5} parent=23 // pred_fallthru
        _
    $region24: #{forward.5} parent=5 // pred_fallthru
      _
    %p150 = scmp.le.s32.totalorder 1, %s9
    %p151 = scmp.lt.s32.totalorder %s9, 3
    %p152 = pnand %p150, %p151
    %p153 = pneg %p152
    // Predicated region
    $region29: #{forward.5} parent=5 // pred_check
      _
    $region30: #{forward.5} parent=5 // pred_check_branch
      %155 = sbr.rel (%p152) target = $region32
    $region31: #{forward.5} parent=5 // pred_region
      %s156 = ssub.s32 %s9, 1
      %p157 = scmp.lt.s32.totalorder %s18, 1
      %s158 = scalar_select %p157, %s18, 1
      %s159 = smul.addr %s158, 16
      %s160 = smul.addr %s159, 4
      %s161 = scalar_lea.vmem %s0, %s160
      %p162 = pneg %p47
      %p163 = pneg %p44
      %p164 = pneg %p68
      %p165 = pneg %p65
      %p166 = pneg %p89
      %p167 = pneg %p86
      %p168 = pneg %p117
      %p169 = pneg %p114
      %s170 = smul.u32 7, %s19
      %p171 = scmp.lt.s32.totalorder %s18, 1
      %s172 = scalar_select %p171, %s18, 1
      %p173 = scmp.lt.s32.totalorder %s170, 6
      %s174 = scalar_select %p173, %s170, 6
      %s175 = smul.addr %s172, 7
      %s176 = sadd.s32 %s174, %s175
      %s177 = smul.addr %s176, 8
      %s178 = scalar_lea.vmem %s3, %s177
      %p179 = scmp.lt.s32.totalorder %s18, 1
      %s180 = scalar_select %p179, %s18, 1
      %s181 = smul.addr %s180, 16
      %s182 = smul.addr %s181, 4
      %s183 = scalar_lea.vmem %s0, %s182
      %s184 = smul.u32 7, %s19
      %p185 = scmp.lt.s32.totalorder %s18, 1
      %s186 = scalar_select %p185, %s18, 1
      %p187 = scmp.lt.s32.totalorder %s184, 6
      %s188 = scalar_select %p187, %s184, 6
      %s189 = smul.addr %s186, 7
      %s190 = sadd.s32 %s188, %s189
      %s191 = smul.addr %s190, 8
      %s192 = scalar_lea.vmem %s3, %s191
      %s193 = smul.u32 7, %s19
      %s195 = smul.u32 %s19, 56
      %s196 = sshra.s32 %s195, 3
      %s197 = sand.u32 %s195, 7
      %s198 = smul.addr %s196, 4
      %s199 = scalar_lea.vmem %s183, %s198
      %v200 = vld [vmem:[%s199] sm:$0xf]
      %v201 = vld [vmem:[%s199 + $0x4] sm:$0xf]
      %v202 = vld [vmem:[%s199 + $0x8] sm:$0xf]
      %v203 = vld [vmem:[%s199 + $0xc] sm:$0xf]
      %v204 = vld [vmem:[%s199 + $0x10] sm:$0xf]
      %v205 = vld [vmem:[%s199 + $0x14] sm:$0xf]
      %v206 = vld [vmem:[%s199 + $0x18] sm:$0xf]
      %v207 = vld [vmem:[%s199 + $0x1c] sm:$0x1]
      %s208 = sadd.s32 %s196, 8
      %s209 = smul.addr %s208, 4
      %s210 = scalar_lea.vmem %s183, %s209
      %v211 = vld [vmem:[%s210] sm:$0xf]
      %v212 = vld [vmem:[%s210 + $0x4] sm:$0xf]
      %v213 = vld [vmem:[%s210 + $0x8] sm:$0xf]
      %v214 = vld [vmem:[%s210 + $0xc] sm:$0xf]
      %v215 = vld [vmem:[%s210 + $0x10] sm:$0xf]
      %v216 = vld [vmem:[%s210 + $0x14] sm:$0xf]
      %v217 = vld [vmem:[%s210 + $0x18] sm:$0xf]
      %v225 = vunpack.c.l.b16 %v200
      %v226 = vunpack.c.l.b16 %v201
      %v227 = vunpack.c.l.b16 %v202
      %v228 = vunpack.c.l.b16 %v203
      %v229 = vunpack.c.l.b16 %v204
      %v230 = vunpack.c.l.b16 %v205
      %v231 = vunpack.c.l.b16 %v206
      %v232 = vpack.c.b16 %v226, %v225
      %v233 = vpack.c.b16 %v228, %v227
      %v234 = vpack.c.b16 %v230, %v229
      %v235 = vpack.c.b16 %v231, %v231
      %v247 = vunpack.c.l.b16 %v211
      %v248 = vunpack.c.l.b16 %v212
      %v249 = vunpack.c.l.b16 %v213
      %v250 = vunpack.c.l.b16 %v214
      %v251 = vunpack.c.l.b16 %v215
      %v252 = vunpack.c.l.b16 %v216
      %v253 = vunpack.c.l.b16 %v217
      %v254 = vpack.c.b16 %v248, %v247
      %v255 = vpack.c.b16 %v250, %v249
      %v256 = vpack.c.b16 %v252, %v251
      %v257 = vpack.c.b16 %v253, %v253
      %v263 = vunpack.c.l.b16 %v207
      %v264 = vpack.c.b16 %v263, %v231
      %vm265 = vsmask.f32 7424
      %v267 = vshrl.u32 %v232, 16
      %v269 = vshll.u32 %v232, 16
      %v271 = vrot.slane %v269, 1
      %v272 = vor.u32 %v267, %v271
      %v274 = vshll.u32 %v233, 16
      %v276 = vrot.slane %v274, 1
      %v277 = vsel %vm265, %v272, %v276
      %v278 = vshrl.u32 %v233, 16
      %v280 = vor.u32 %v278, %v276
      %v282 = vshll.u32 %v234, 16
      %v284 = vrot.slane %v282, 1
      %v285 = vsel %vm265, %v280, %v284
      %v286 = vshrl.u32 %v234, 16
      %v288 = vor.u32 %v286, %v284
      %v290 = vshll.u32 %v264, 16
      %v292 = vrot.slane %v290, 1
      %v293 = vsel %vm265, %v288, %v292
      %v294 = vshrl.u32 %v264, 16
      %v296 = vor.u32 %v294, %v292
      %v301 = vld [vmem:[%s1] sm:$0xf]
      %v302 = vld [vmem:[%s1 + $0x4] sm:$0xf]
      %v303 = vld [vmem:[%s1 + $0x8] sm:$0xf]
      %v304 = vld [vmem:[%s1 + $0xc] sm:$0xf]
      %v305 = vld [vmem:[%s1 + $0x10] sm:$0xf]
      %v306 = vld [vmem:[%s1 + $0x14] sm:$0xf]
      %v307 = vld [vmem:[%s1 + $0x18] sm:$0xf]
      %v308 = vld [vmem:[%s1 + $0x1c] sm:$0xf]
      %v309 = vld [vmem:[%s1 + $0x20] sm:$0xf]
      %v310 = vld [vmem:[%s1 + $0x24] sm:$0xf]
      %v311 = vld [vmem:[%s1 + $0x28] sm:$0xf]
      %v312 = vld [vmem:[%s1 + $0x2c] sm:$0xf]
      %v313 = vld [vmem:[%s1 + $0x30] sm:$0xf]
      %v314 = vld [vmem:[%s1 + $0x34] sm:$0xf]
      %v315 = vld [vmem:[%s1 + $0x38] sm:$0xf]
      %v316 = vld [vmem:[%s1 + $0x3c] sm:$0xf]
      %v317 = vld [vmem:[%s1 + $0x40] sm:$0xf]
      %v318 = vld [vmem:[%s1 + $0x44] sm:$0xf]
      %v319 = vld [vmem:[%s1 + $0x48] sm:$0xf]
      %v320 = vld [vmem:[%s1 + $0x4c] sm:$0xf]
      %v321 = vld [vmem:[%s1 + $0x50] sm:$0xf]
      %v322 = vld [vmem:[%s1 + $0x54] sm:$0xf]
      %v323 = vld [vmem:[%s1 + $0x58] sm:$0xf]
      %v324 = vld [vmem:[%s1 + $0x5c] sm:$0xf]
      %v325 = vld [vmem:[%s1 + $0x60] sm:$0xf]
      %v326 = vld [vmem:[%s1 + $0x64] sm:$0xf]
      %v327 = vld [vmem:[%s1 + $0x68] sm:$0xf]
      %v328 = vld [vmem:[%s1 + $0x6c] sm:$0xf]
      %v329 = vld [vmem:[%s1 + $0x70] sm:$0xf]
      %v330 = vld [vmem:[%s1 + $0x74] sm:$0xf]
      %v331 = vld [vmem:[%s1 + $0x78] sm:$0xf]
      %v332 = vld [vmem:[%s1 + $0x7c] sm:$0xf]
      %v333 = vld [vmem:[%s1 + $0x80] sm:$0xf]
      %v334 = vld [vmem:[%s1 + $0x84] sm:$0xf]
      %v335 = vld [vmem:[%s1 + $0x88] sm:$0xf]
      %v336 = vld [vmem:[%s1 + $0x8c] sm:$0xf]
      %v337 = vld [vmem:[%s1 + $0x90] sm:$0xf]
      %v338 = vld [vmem:[%s1 + $0x94] sm:$0xf]
      %v339 = vld [vmem:[%s1 + $0x98] sm:$0xf]
      %v340 = vld [vmem:[%s1 + $0x9c] sm:$0xf]
      %v341 = vld [vmem:[%s1 + $0xa0] sm:$0xf]
      %v342 = vld [vmem:[%s1 + $0xa4] sm:$0xf]
      %v343 = vld [vmem:[%s1 + $0xa8] sm:$0xf]
      %v344 = vld [vmem:[%s1 + $0xac] sm:$0xf]
      %v345 = vld [vmem:[%s1 + $0xb0] sm:$0xf]
      %v346 = vld [vmem:[%s1 + $0xb4] sm:$0xf]
      %v347 = vld [vmem:[%s1 + $0xb8] sm:$0xf]
      %v348 = vld [vmem:[%s1 + $0xbc] sm:$0xf]
      %v349 = vld [vmem:[%s2] sm:$0x1]
      %v351 = vlaneseq
      %v352 = vshrl.u32 %v351, 7
      %v353 = vsub.s32 0, %v352
      %v354 = vrot.slane %v349, %v353
      %v404 = vunpack.c.l.b16 %v301
      %v405 = vunpack.c.l.b16 %v302
      %v406 = vunpack.c.l.b16 %v303
      %v407 = vunpack.c.l.b16 %v304
      %v408 = vunpack.c.l.b16 %v305
      %v409 = vunpack.c.l.b16 %v306
      %v410 = vunpack.c.l.b16 %v307
      %v411 = vunpack.c.l.b16 %v308
      %v412 = vunpack.c.l.b16 %v309
      %v413 = vunpack.c.l.b16 %v310
      %v414 = vunpack.c.l.b16 %v311
      %v415 = vunpack.c.l.b16 %v312
      %v416 = vunpack.c.l.b16 %v313
      %v417 = vunpack.c.l.b16 %v314
      %v418 = vunpack.c.l.b16 %v315
      %v419 = vunpack.c.l.b16 %v316
      %v420 = vunpack.c.l.b16 %v317
      %v421 = vunpack.c.l.b16 %v318
      %v422 = vunpack.c.l.b16 %v319
      %v423 = vunpack.c.l.b16 %v320
      %v424 = vunpack.c.l.b16 %v321
      %v425 = vunpack.c.l.b16 %v322
      %v426 = vunpack.c.l.b16 %v323
      %v427 = vunpack.c.l.b16 %v324
      %v428 = vunpack.c.l.b16 %v325
      %v429 = vunpack.c.l.b16 %v326
      %v430 = vunpack.c.l.b16 %v327
      %v431 = vunpack.c.l.b16 %v328
      %v432 = vunpack.c.l.b16 %v329
      %v433 = vunpack.c.l.b16 %v330
      %v434 = vunpack.c.l.b16 %v331
      %v435 = vunpack.c.l.b16 %v332
      %v436 = vunpack.c.l.b16 %v333
      %v437 = vunpack.c.l.b16 %v334
      %v438 = vunpack.c.l.b16 %v335
      %v439 = vunpack.c.l.b16 %v336
      %v440 = vunpack.c.l.b16 %v337
      %v441 = vunpack.c.l.b16 %v338
      %v442 = vunpack.c.l.b16 %v339
      %v443 = vunpack.c.l.b16 %v340
      %v444 = vunpack.c.l.b16 %v341
      %v445 = vunpack.c.l.b16 %v342
      %v446 = vunpack.c.l.b16 %v343
      %v447 = vunpack.c.l.b16 %v344
      %v448 = vunpack.c.l.b16 %v345
      %v449 = vunpack.c.l.b16 %v346
      %v450 = vunpack.c.l.b16 %v347
      %v451 = vunpack.c.l.b16 %v348
      %v452 = vpack.c.b16 %v405, %v404
      %v453 = vpack.c.b16 %v407, %v406
      %v454 = vpack.c.b16 %v409, %v408
      %v455 = vpack.c.b16 %v411, %v410
      %v456 = vpack.c.b16 %v413, %v412
      %v457 = vpack.c.b16 %v415, %v414
      %v458 = vpack.c.b16 %v417, %v416
      %v459 = vpack.c.b16 %v419, %v418
      %v460 = vpack.c.b16 %v421, %v420
      %v461 = vpack.c.b16 %v423, %v422
      %v462 = vpack.c.b16 %v425, %v424
      %v463 = vpack.c.b16 %v427, %v426
      %v464 = vpack.c.b16 %v429, %v428
      %v465 = vpack.c.b16 %v431, %v430
      %v466 = vpack.c.b16 %v433, %v432
      %v467 = vpack.c.b16 %v435, %v434
      %v468 = vpack.c.b16 %v437, %v436
      %v469 = vpack.c.b16 %v439, %v438
      %v470 = vpack.c.b16 %v441, %v440
      %v471 = vpack.c.b16 %v443, %v442
      %v472 = vpack.c.b16 %v445, %v444
      %v473 = vpack.c.b16 %v447, %v446
      %v474 = vpack.c.b16 %v449, %v448
      %v475 = vpack.c.b16 %v451, %v450
      %500 = vmatprep.subr.bf16.mxu0 0
      %501 = vmatpush1.bf16.msra.mxu0 %v452
      %502 = vmatprep.subr.bf16.mxu0 0
      %503 = vmatpush1.bf16.msra.mxu0 %v453
      %504 = vmatprep.subr.bf16.mxu0 0
      %505 = vmatpush1.bf16.msra.mxu0 %v454
      %506 = vmatprep.subr.bf16.mxu0 0
      %507 = vmatpush1.bf16.msra.mxu0 %v455
      %508 = vmatprep.subr.bf16.mxu0 0
      %509 = vmatpush1.bf16.msra.mxu0 %v456
      %510 = vmatprep.subr.bf16.mxu0 0
      %511 = vmatpush1.bf16.msra.mxu0 %v457
      %512 = vmatprep.subr.bf16.mxu0 0
      %513 = vmatpush1.bf16.msra.mxu0 %v458
      %514 = vmatprep.subr.bf16.mxu0 0
      %515 = vmatpush1.bf16.msra.mxu0 %v459
      %516 = vmatprep.subr.bf16.mxu0 0
      %517 = vmatpush1.bf16.msra.mxu0 %v460
      %518 = vmatprep.subr.bf16.mxu0 0
      %519 = vmatpush1.bf16.msra.mxu0 %v461
      %520 = vmatprep.subr.bf16.mxu0 0
      %521 = vmatpush1.bf16.msra.mxu0 %v462
      %522 = vmatprep.subr.bf16.mxu0 0
      %523 = vmatpush1.bf16.msra.mxu0 %v463
      %524 = vmatprep.subr.bf16.mxu0 0
      %525 = vmatpush1.bf16.msra.mxu0 %v464
      %526 = vmatprep.subr.bf16.mxu0 0
      %527 = vmatpush1.bf16.msra.mxu0 %v465
      %528 = vmatprep.subr.bf16.mxu0 0
      %529 = vmatpush1.bf16.msra.mxu0 %v466
      %530 = vmatprep.subr.bf16.mxu0 0
      %531 = vmatpush1.bf16.msra.mxu0 %v467
      %532 = vmatprep.mubr.bf16.mxu0 %v254
      %533 = vmatmul.mubr.bf16.gmra.mrb[0].mxu0 %v232
      %v534 = vpop.f32.mrb[0].mxu0
      %v535 = vadd.f32 %v354, %v534
      %v536 = vpop.f32.mrb[0].mxu0
      %v537 = vpop.f32.mrb[0].mxu0
      %v538 = vadd.f32 %v354, %v537
      %v539 = vpop.f32.mrb[0].mxu0
      %540 = vmatprep.mubr.bf16.mxu0 %v255
      %541 = vmatmul.mubr.bf16.gmra.mrb[0].mxu0 %v233
      %v542 = vpop.f32.mrb[0].mxu0
      %v543 = vadd.f32 %v354, %v542
      %v544 = vpop.f32.mrb[0].mxu0
      %v545 = vpop.f32.mrb[0].mxu0
      %v546 = vadd.f32 %v354, %v545
      %v547 = vpop.f32.mrb[0].mxu0
      %548 = vmatprep.mubr.bf16.mxu0 %v256
      %549 = vmatmul.mubr.bf16.gmra.mrb[0].mxu0 %v234
      %v550 = vpop.f32.mrb[0].mxu0
      %v551 = vadd.f32 %v354, %v550
      %v552 = vpop.f32.mrb[0].mxu0
      %v553 = vpop.f32.mrb[0].mxu0
      %v554 = vadd.f32 %v354, %v553
      %v555 = vpop.f32.mrb[0].mxu0
      %556 = vmatprep.mubr.bf16.mxu0 %v257
      %557 = vmatmul.mubr.bf16.gmra.mrb[0].mxu0 %v235
      %v558 = vpop.f32.mrb[0].mxu0
      %v559 = vadd.f32 %v354, %v558
      %v560 = vpop.f32.mrb[0].mxu0
      %v561 = vpop.f32.mrb[0].mxu0
      %v562 = vpop.f32.mrb[0].mxu0
      %563 = vdwg.mxu0
      %564 = vmatprep.subr.bf16.mxu0 0
      %565 = vmatpush1.bf16.msra.mxu0 %v468
      %566 = vmatprep.subr.bf16.mxu0 0
      %567 = vmatpush1.bf16.msra.mxu0 %v469
      %568 = vmatprep.subr.bf16.mxu0 0
      %569 = vmatpush1.bf16.msra.mxu0 %v470
      %570 = vmatprep.subr.bf16.mxu0 0
      %571 = vmatpush1.bf16.msra.mxu0 %v471
      %572 = vmatprep.subr.bf16.mxu0 0
      %573 = vmatpush1.bf16.msra.mxu0 %v472
      %574 = vmatprep.subr.bf16.mxu0 0
      %575 = vmatpush1.bf16.msra.mxu0 %v473
      %576 = vmatprep.subr.bf16.mxu0 0
      %577 = vmatpush1.bf16.msra.mxu0 %v474
      %578 = vmatprep.subr.bf16.mxu0 0
      %579 = vmatpush1.bf16.msra.mxu0 %v475
      %580 = vmatprep.subr.bf16.mxu0 0
      %581 = vmatpush1.bf16.msra.mxu0 0
      %582 = vmatprep.subr.bf16.mxu0 0
      %583 = vmatpush1.bf16.msra.mxu0 0
      %584 = vmatprep.subr.bf16.mxu0 0
      %585 = vmatpush1.bf16.msra.mxu0 0
      %586 = vmatprep.subr.bf16.mxu0 0
      %587 = vmatpush1.bf16.msra.mxu0 0
      %588 = vmatprep.subr.bf16.mxu0 0
      %589 = vmatpush1.bf16.msra.mxu0 0
      %590 = vmatprep.subr.bf16.mxu0 0
      %591 = vmatpush1.bf16.msra.mxu0 0
      %592 = vmatprep.subr.bf16.mxu0 0
      %593 = vmatpush1.bf16.msra.mxu0 0
      %594 = vmatprep.subr.bf16.mxu0 0
      %595 = vmatpush1.bf16.msra.mxu0 0
      %596 = vmatprep.mubr.bf16.mxu0 0
      %597 = vmatmul.mubr.bf16.gmra.mrb[0].mxu0 %v277
      %v598 = vpop.f32.mrb[0].mxu0
      %v599 = vadd.f32 %v535, %v598
      %v600 = vpop.f32.mrb[0].mxu0
      %v601 = vpop.f32.mrb[0].mxu0
      %v602 = vadd.f32 %v538, %v601
      %v603 = vpop.f32.mrb[0].mxu0
      %604 = vmatprep.mubr.bf16.mxu0 0
      %605 = vmatmul.mubr.bf16.gmra.mrb[0].mxu0 %v285
      %v606 = vpop.f32.mrb[0].mxu0
      %v607 = vadd.f32 %v543, %v606
      %v608 = vpop.f32.mrb[0].mxu0
      %v609 = vpop.f32.mrb[0].mxu0
      %v610 = vadd.f32 %v546, %v609
      %v611 = vpop.f32.mrb[0].mxu0
      %612 = vmatprep.mubr.bf16.mxu0 0
      %613 = vmatmul.mubr.bf16.gmra.mrb[0].mxu0 %v293
      %v614 = vpop.f32.mrb[0].mxu0
      %v615 = vadd.f32 %v551, %v614
      %v616 = vpop.f32.mrb[0].mxu0
      %v617 = vpop.f32.mrb[0].mxu0
      %v618 = vadd.f32 %v554, %v617
      %v619 = vpop.f32.mrb[0].mxu0
      %620 = vmatprep.mubr.bf16.mxu0 0
      %621 = vmatmul.mubr.bf16.gmra.mrb[0].mxu0 %v296
      %v622 = vpop.f32.mrb[0].mxu0
      %v623 = vadd.f32 %v559, %v622
      %v624 = vpop.f32.mrb[0].mxu0
      %v625 = vpop.f32.mrb[0].mxu0
      %v626 = vpop.f32.mrb[0].mxu0
      %627 = vdwg.mxu0
      %v628 = vmul.f32 %v599, 0.5
      %v629 = vmul.f32 %v602, 0.5
      %v630 = vmul.f32 %v607, 0.5
      %v631 = vmul.f32 %v610, 0.5
      %v632 = vmul.f32 %v615, 0.5
      %v633 = vmul.f32 %v618, 0.5
      %v634 = vmul.f32 %v623, 0.5
      %v635 = vmul.f32 %v599, 0.70710677
      %v636 = vmul.f32 %v602, 0.70710677
      %v637 = vmul.f32 %v607, 0.70710677
      %v638 = vmul.f32 %v610, 0.70710677
      %v639 = vmul.f32 %v615, 0.70710677
      %v640 = vmul.f32 %v618, 0.70710677
      %v641 = vmul.f32 %v623, 0.70710677
      %v642 = vand.u32 2147483647, %v635
      %v643 = vand.u32 2147483647, %v636
      %v644 = vand.u32 2147483647, %v637
      %v645 = vand.u32 2147483647, %v638
      %v646 = vand.u32 2147483647, %v639
      %v647 = vand.u32 2147483647, %v640
      %v648 = vand.u32 2147483647, %v641
      %v649 = vmul.f32 %v642, 0.3275911
      %v650 = vmul.f32 %v643, 0.3275911
      %v651 = vmul.f32 %v644, 0.3275911
      %v652 = vmul.f32 %v645, 0.3275911
      %v653 = vmul.f32 %v646, 0.3275911
      %v654 = vmul.f32 %v647, 0.3275911
      %v655 = vmul.f32 %v648, 0.3275911
      %v656 = vadd.f32 %v649, 1.0
      %v657 = vadd.f32 %v650, 1.0
      %v658 = vadd.f32 %v651, 1.0
      %v659 = vadd.f32 %v652, 1.0
      %v660 = vadd.f32 %v653, 1.0
      %v661 = vadd.f32 %v654, 1.0
      %v662 = vadd.f32 %v655, 1.0
      %v663 = vrcp.pop %v656
      %v664 = vrcp.pop %v657
      %v665 = vrcp.pop %v658
      %v666 = vrcp.pop %v659
      %v667 = vrcp.pop %v660
      %v668 = vrcp.pop %v661
      %v669 = vrcp.pop %v662
      %v670 = vmul.f32 %v663, 1.0614054
      %v671 = vmul.f32 %v664, 1.0614054
      %v672 = vmul.f32 %v665, 1.0614054
      %v673 = vmul.f32 %v666, 1.0614054
      %v674 = vmul.f32 %v667, 1.0614054
      %v675 = vmul.f32 %v668, 1.0614054
      %v676 = vmul.f32 %v669, 1.0614054
      %v677 = vadd.f32 %v670, -1.4531521
      %v678 = vadd.f32 %v671, -1.4531521
      %v679 = vadd.f32 %v672, -1.4531521
      %v680 = vadd.f32 %v673, -1.4531521
      %v681 = vadd.f32 %v674, -1.4531521
      %v682 = vadd.f32 %v675, -1.4531521
      %v683 = vadd.f32 %v676, -1.4531521
      %v684 = vmul.f32 %v677, %v663
      %v685 = vmul.f32 %v678, %v664
      %v686 = vmul.f32 %v679, %v665
      %v687 = vmul.f32 %v680, %v666
      %v688 = vmul.f32 %v681, %v667
      %v689 = vmul.f32 %v682, %v668
      %v690 = vmul.f32 %v683, %v669
      %v691 = vadd.f32 %v684, 1.4214138
      %v692 = vadd.f32 %v685, 1.4214138
      %v693 = vadd.f32 %v686, 1.4214138
      %v694 = vadd.f32 %v687, 1.4214138
      %v695 = vadd.f32 %v688, 1.4214138
      %v696 = vadd.f32 %v689, 1.4214138
      %v697 = vadd.f32 %v690, 1.4214138
      %v698 = vmul.f32 %v691, %v663
      %v699 = vmul.f32 %v692, %v664
      %v700 = vmul.f32 %v693, %v665
      %v701 = vmul.f32 %v694, %v666
      %v702 = vmul.f32 %v695, %v667
      %v703 = vmul.f32 %v696, %v668
      %v704 = vmul.f32 %v697, %v669
      %v705 = vadd.f32 %v698, -0.28449672
      %v706 = vadd.f32 %v699, -0.28449672
      %v707 = vadd.f32 %v700, -0.28449672
      %v708 = vadd.f32 %v701, -0.28449672
      %v709 = vadd.f32 %v702, -0.28449672
      %v710 = vadd.f32 %v703, -0.28449672
      %v711 = vadd.f32 %v704, -0.28449672
      %v712 = vmul.f32 %v705, %v663
      %v713 = vmul.f32 %v706, %v664
      %v714 = vmul.f32 %v707, %v665
      %v715 = vmul.f32 %v708, %v666
      %v716 = vmul.f32 %v709, %v667
      %v717 = vmul.f32 %v710, %v668
      %v718 = vmul.f32 %v711, %v669
      %v719 = vadd.f32 %v712, 0.2548296
      %v720 = vadd.f32 %v713, 0.2548296
      %v721 = vadd.f32 %v714, 0.2548296
      %v722 = vadd.f32 %v715, 0.2548296
      %v723 = vadd.f32 %v716, 0.2548296
      %v724 = vadd.f32 %v717, 0.2548296
      %v725 = vadd.f32 %v718, 0.2548296
      %v726 = vmul.f32 %v719, %v663
      %v727 = vmul.f32 %v720, %v664
      %v728 = vmul.f32 %v721, %v665
      %v729 = vmul.f32 %v722, %v666
      %v730 = vmul.f32 %v723, %v667
      %v731 = vmul.f32 %v724, %v668
      %v732 = vmul.f32 %v725, %v669
      %v733 = vsub.f32 0.0, %v642
      %v734 = vsub.f32 0.0, %v643
      %v735 = vsub.f32 0.0, %v644
      %v736 = vsub.f32 0.0, %v645
      %v737 = vsub.f32 0.0, %v646
      %v738 = vsub.f32 0.0, %v647
      %v739 = vsub.f32 0.0, %v648
      %v740 = vmul.f32 %v733, %v642
      %v741 = vmul.f32 %v734, %v643
      %v742 = vmul.f32 %v735, %v644
      %v743 = vmul.f32 %v736, %v645
      %v744 = vmul.f32 %v737, %v646
      %v745 = vmul.f32 %v738, %v647
      %v746 = vmul.f32 %v739, %v648
      %v747 = vmul.f32 %v740, 1.442695
      %v748 = vpow.pop %v747
      %v749 = vmul.f32 %v741, 1.442695
      %v750 = vpow.pop %v749
      %v751 = vmul.f32 %v742, 1.442695
      %v752 = vpow.pop %v751
      %v753 = vmul.f32 %v743, 1.442695
      %v754 = vpow.pop %v753
      %v755 = vmul.f32 %v744, 1.442695
      %v756 = vpow.pop %v755
      %v757 = vmul.f32 %v745, 1.442695
      %v758 = vpow.pop %v757
      %v759 = vmul.f32 %v746, 1.442695
      %v760 = vpow.pop %v759
      %v761 = vmul.f32 %v726, %v748
      %v762 = vmul.f32 %v727, %v750
      %v763 = vmul.f32 %v728, %v752
      %v764 = vmul.f32 %v729, %v754
      %v765 = vmul.f32 %v730, %v756
      %v766 = vmul.f32 %v731, %v758
      %v767 = vmul.f32 %v732, %v760
      %v768 = vsub.f32 1.0, %v761
      %v769 = vsub.f32 1.0, %v762
      %v770 = vsub.f32 1.0, %v763
      %v771 = vsub.f32 1.0, %v764
      %v772 = vsub.f32 1.0, %v765
      %v773 = vsub.f32 1.0, %v766
      %v774 = vsub.f32 1.0, %v767
      %vm775 = vcmp.ge.f32.partialorder %v635, 0.0
      %vm776 = vcmp.ge.f32.partialorder %v636, 0.0
      %vm777 = vcmp.ge.f32.partialorder %v637, 0.0
      %vm778 = vcmp.ge.f32.partialorder %v638, 0.0
      %vm779 = vcmp.ge.f32.partialorder %v639, 0.0
      %vm780 = vcmp.ge.f32.partialorder %v640, 0.0
      %vm781 = vcmp.ge.f32.partialorder %v641, 0.0
      %v782 = vsub.f32 0.0, %v768
      %v783 = vsub.f32 0.0, %v769
      %v784 = vsub.f32 0.0, %v770
      %v785 = vsub.f32 0.0, %v771
      %v786 = vsub.f32 0.0, %v772
      %v787 = vsub.f32 0.0, %v773
      %v788 = vsub.f32 0.0, %v774
      %v789 = vsel %vm775, %v768, %v782
      %v790 = vsel %vm776, %v769, %v783
      %v791 = vsel %vm777, %v770, %v784
      %v792 = vsel %vm778, %v771, %v785
      %v793 = vsel %vm779, %v772, %v786
      %v794 = vsel %vm780, %v773, %v787
      %v795 = vsel %vm781, %v774, %v788
      %v796 = vadd.f32 %v789, 1.0
      %v797 = vadd.f32 %v790, 1.0
      %v798 = vadd.f32 %v791, 1.0
      %v799 = vadd.f32 %v792, 1.0
      %v800 = vadd.f32 %v793, 1.0
      %v801 = vadd.f32 %v794, 1.0
      %v802 = vadd.f32 %v795, 1.0
      %v803 = vmul.f32 %v628, %v796
      %v804 = vmul.f32 %v629, %v797
      %v805 = vmul.f32 %v630, %v798
      %v806 = vmul.f32 %v631, %v799
      %v807 = vmul.f32 %v632, %v800
      %v808 = vmul.f32 %v633, %v801
      %v809 = vmul.f32 %v634, %v802
      %810 = vst [vmem:[%s192] sm:$0xff] %v803
      %811 = vst [vmem:[%s192 + $0x8] sm:$0xff] %v804
      %812 = vst [vmem:[%s192 + $0x10] sm:$0xff] %v805
      %813 = vst [vmem:[%s192 + $0x18] sm:$0xff] %v806
      %814 = vst [vmem:[%s192 + $0x20] sm:$0xff] %v807
      %815 = vst [vmem:[%s192 + $0x28] sm:$0xff] %v808
      %816 = vst [vmem:[%s192 + $0x30] sm:$0xff] %v809
      %s817 = smul.u32 7, %s19
      %p818 = scmp.lt.s32.totalorder %s18, 1
      %s819 = scalar_select %p818, %s18, 1
      %p820 = scmp.lt.s32.totalorder %s817, 6
      %s821 = scalar_select %p820, %s817, 6
      %s822 = smul.addr %s819, 7
      %s823 = sadd.s32 %s821, %s822
      %s824 = smul.addr %s823, 8
      %s825 = scalar_lea.vmem %s3, %s824
      // Predicated region
      $region33: #{forward.5} parent=31 // pred_check
        %p826 = pneg %p114
      $region34: #{forward.5} parent=31 // pred_check_branch
        %828 = sbr.rel (%p826) target = $region36
      $region35: #{forward.5} parent=31 // pred_region
        %s829 = smul.u32 7, %s19
      $region36: #{forward.5} parent=31 // pred_fallthru
        _
    $region32: #{forward.5} parent=5 // pred_fallthru
      _
    %p830 = scmp.le.s32.totalorder 2, %s9
    // Predicated region
    $region37: #{forward.5} parent=5 // pred_check
      %p831 = pneg %p830
    $region38: #{forward.5} parent=5 // pred_check_branch
      %833 = sbr.rel (%p831) target = $region40
    $region39: #{forward.5} parent=5 // pred_region
      %s834 = ssub.s32 %s9, 2
      // Predicated region
      $region41: #{forward.5} parent=39 // pred_check
        %p835 = pneg %p120
      $region42: #{forward.5} parent=39 // pred_check_branch
        %837 = sbr.rel (%p835) target = $region44
      $region43: #{forward.5} parent=39 // pred_region
        %s838 = smul.u32 7, %s21
        %p839 = scmp.lt.s32.totalorder %s20, 1
        %s840 = scalar_select %p839, %s20, 1
        %p841 = scmp.lt.s32.totalorder %s838, 6
        %s842 = scalar_select %p841, %s838, 6
        %s843 = smul.addr %s840, 7
        %s844 = sadd.s32 %s842, %s843
        %s845 = smul.addr %s844, 8
        %s846 = scalar_lea.vmem %s3, %s845
      $region44: #{forward.5} parent=39 // pred_fallthru
        _
    $region40: #{forward.5} parent=5 // pred_fallthru
      _
  $region6: #{forward.5} parent=0 // loop_footer
    %s13 = sadd.s32 1, %s9
  $region7: #{forward.5} parent=0 // loop_footer_branch
    %8 = sbr.rel target = $region3
  $region8: #{forward.5} parent=0 // loop_exit
    _

</llo_original>
